<compile_context>
chip_gen: v5e
topology: v5e:2x2
jax: 0.10.0
libtpu: 0.0.40
codegen_flags: <defaults>
</compile_context>

<pallas_src>
import jax
import jax.numpy as jnp
from jax.experimental import pallas as pl
from jax.experimental.pallas import tpu as pltpu


def _im2col_3x3(act):
    """(R, S, C) activation -> (R, S, 9C) tap slab for a 3x3 / padding=1 conv.

    Tap order along the last dim is (d_row, d_col, c): d_row indexes the leading
    axis offset, d_col the sublane axis offset, matching a row-major-flattened
    (d_row, d_col, C, Cout) weight.
    """
    r, s, c = act.shape
    zcol = jnp.zeros((r, 1, c), act.dtype)
    left = jnp.concatenate([zcol, act[:, :s - 1, :]], axis=1)    # tap d_col = 0
    right = jnp.concatenate([act[:, 1:, :], zcol], axis=1)       # tap d_col = 2
    cols = jnp.concatenate([left, act, right], axis=-1)          # (R, S, 3C)
    zrow = jnp.zeros((1, s, 3 * c), act.dtype)
    up = jnp.concatenate([zrow, cols[:r - 1, :, :]], axis=0)     # tap d_row = 0
    down = jnp.concatenate([cols[1:, :, :], zrow], axis=0)       # tap d_row = 2
    return jnp.concatenate([up, cols, down], axis=-1)            # (R, S, 9C)


def _conv3x3(act, w_ref, b_ref=None):
    """act (R, S, Cin) x w_ref (9*Cin, Cout) [+ b_ref] -> (R, S, Cout) in f32."""
    r, s, c = act.shape
    co = w_ref.shape[-1]
    slab = _im2col_3x3(act).reshape(r * s, 9 * c).astype(w_ref.dtype)
    y = jnp.dot(slab, w_ref[...], preferred_element_type=jnp.float32)
    if b_ref is not None:
        y = y + b_ref[...]
    return y.reshape(r, s, co)


def _attention_block_kernel(
    g_ref, x_ref,
    g_scale_ref, g_shift_ref, g_w_ref,
    x_scale_ref, x_shift_ref, x_w_ref,
    gc_scale_ref, gc_shift_ref, gc_w_ref, gc_b_ref,
    o_ref,
):
    W2, H2, Cg = g_ref.shape      # g is W-major; its spatial is 2x the x spatial
    H, W, Cx = x_ref.shape
    Co = o_ref.shape[-1]

    # ---------- g branch: BN -> ReLU -> Conv3x3 (bias folded out) -> MaxPool(2, 2) ----
    g_act = jnp.maximum(g_ref[...] * g_scale_ref[...] + g_shift_ref[...], 0.0)
    g_conv = _conv3x3(g_act, g_w_ref)                            # (W2, H2, Co)
    # W-pair reduction: free leading-dim reshape + max (all in registers).
    g_wp = jnp.max(g_conv.reshape(W, 2, H2, Co), axis=1)         # (W, H2, Co)
    # One lane-preserving transpose, then the H-pair reduction is leading-dim too.
    g_wp = pltpu.einshape("whc->hwc", g_wp)                      # (H2, W, Co)
    g_pool = jnp.max(g_wp.reshape(H, 2, W, Co), axis=1)          # (H, W, Co)

    # ---------- x branch: BN -> ReLU -> Conv3x3 (bias folded out) ----------
    x_raw = x_ref[...]
    x_act = jnp.maximum(x_raw * x_scale_ref[...] + x_shift_ref[...], 0.0)
    x_conv = _conv3x3(x_act, x_w_ref)                            # (H, W, Co)

    # ---------- combine: (g_pool + x_conv) -> BN (with folded biases) -> ReLU
    # ---------- -> Conv3x3, gate by x ----------
    gc_act = jnp.maximum(
        (g_pool + x_conv) * gc_scale_ref[...] + gc_shift_ref[...], 0.0)
    gc_conv = _conv3x3(gc_act, gc_w_ref, gc_b_ref)               # (H, W, Co)

    o_ref[...] = (gc_conv * x_raw).astype(o_ref.dtype)


def attention_block_pallas(g_nchw, x_nchw, params, mm_dtype=jnp.bfloat16):
    B, Cg, H2, W2 = g_nchw.shape
    _, Cx, H, W = x_nchw.shape
    Co = params["x_w"].shape[-1]
    assert Cx == Co and H2 == 2 * H and W2 == 2 * W

    # x: NCHW -> NHWC.  g: NCHW -> (N, W2, H2, C)  (W-major, see kernel docstring).
    x = jnp.transpose(x_nchw, (0, 2, 3, 1)).astype(jnp.float32)
    g = jnp.transpose(g_nchw, (0, 3, 2, 1)).astype(jnp.float32)

    def bn_fold(bn, eps=1e-5):
        gamma, beta, mean, var = bn
        scale = gamma / jnp.sqrt(var + eps)
        shift = beta - mean * scale
        return scale, shift

    g_scale, g_shift = bn_fold(params["g_bn"])
    x_scale, x_shift = bn_fold(params["x_bn"])
    gc_scale, gc_shift = bn_fold(params["gc_bn"])

    # Max-pool commutes exactly with a per-channel constant, so the g-branch and
    # x-branch conv biases can be folded into the gc-BatchNorm shift host-side.
    gc_shift = gc_shift + (params["g_b"] + params["x_b"]) * gc_scale

    # im2col-flattened weights (cast to the matmul dtype; f32 accumulation in-kernel).
    # The g weight is flattened in (kx, ky, cin) order to match its W-major slab.
    g_w = jnp.transpose(params["g_w"], (1, 0, 2, 3)).reshape(9 * Cg, Co).astype(mm_dtype)
    x_w = params["x_w"].reshape(9 * Cx, Co).astype(mm_dtype)
    gc_w = params["gc_w"].reshape(9 * Co, Co).astype(mm_dtype)

    args = (
        g, x,
        g_scale.reshape(1, 1, Cg), g_shift.reshape(1, 1, Cg), g_w,
        x_scale.reshape(1, 1, Cx), x_shift.reshape(1, 1, Cx), x_w,
        gc_scale.reshape(1, 1, Co), gc_shift.reshape(1, 1, Co),
        gc_w, params["gc_b"].reshape(1, Co).astype(jnp.float32),
    )

    def full(shape):
        n = len(shape)
        return pl.BlockSpec(shape, lambda b, n=n: (0,) * n)

    in_specs = [
        pl.BlockSpec((None, W2, H2, Cg), lambda b: (b, 0, 0, 0)),  # g (W-major)
        pl.BlockSpec((None, H, W, Cx), lambda b: (b, 0, 0, 0)),    # x (NHWC)
        full((1, 1, Cg)), full((1, 1, Cg)), full((9 * Cg, Co)),
        full((1, 1, Cx)), full((1, 1, Cx)), full((9 * Cx, Co)),
        full((1, 1, Co)), full((1, 1, Co)), full((9 * Co, Co)), full((1, Co)),
    ]

    out_nhwc = pl.pallas_call(
        _attention_block_kernel,
        out_shape=jax.ShapeDtypeStruct((B, H, W, Co), jnp.float32),
        grid=(B,),
        in_specs=in_specs,
        out_specs=pl.BlockSpec((None, H, W, Co), lambda b: (b, 0, 0, 0)),
        compiler_params=pltpu.CompilerParams(
            dimension_semantics=("parallel",)),   # megacore: shard batch across TCs
    )(*args)

    return jnp.transpose(out_nhwc, (0, 3, 1, 2))  # back to NCHW


# ------------------------- deterministic parameter init -------------------------
def init_params(key, in_c):
    cg, cx = in_c
    co = cx
    ks = jax.random.split(key, 9)

    def bn(k, c):
        k1, k2, k3, k4 = jax.random.split(k, 4)
        gamma = 1.0 + 0.1 * jax.random.normal(k1, (c,), jnp.float32)
        beta = 0.1 * jax.random.normal(k2, (c,), jnp.float32)
        mean = 0.1 * jax.random.normal(k3, (c,), jnp.float32)
        var = jax.random.uniform(k4, (c,), jnp.float32, minval=0.5, maxval=1.5)
        return (gamma, beta, mean, var)

    return {
        "g_bn": bn(ks[0], cg),
        "g_w": 0.2 * jax.random.normal(ks[1], (3, 3, cg, co), jnp.float32),   # HWIO
        "g_b": 0.1 * jax.random.normal(ks[2], (co,), jnp.float32),
        "x_bn": bn(ks[3], cx),
        "x_w": 0.2 * jax.random.normal(ks[4], (3, 3, cx, co), jnp.float32),
        "x_b": 0.1 * jax.random.normal(ks[5], (co,), jnp.float32),
        "gc_bn": bn(ks[6], co),
        "gc_w": 0.2 * jax.random.normal(ks[7], (3, 3, co, co), jnp.float32),
        "gc_b": 0.1 * jax.random.normal(ks[8], (co,), jnp.float32),
    }


# ------------------------- plain-JAX reference (for self-check) -------------------------
def attention_block_ref(g_nchw, x_nchw, params, conv_dtype=jnp.float32):
    g = jnp.transpose(g_nchw, (0, 2, 3, 1)).astype(jnp.float32)
    x = jnp.transpose(x_nchw, (0, 2, 3, 1)).astype(jnp.float32)

    def bnrelu(t, bn, eps=1e-5):
        gamma, beta, mean, var = bn
        return jnp.maximum(gamma * (t - mean) / jnp.sqrt(var + eps) + beta, 0.0)

    def conv3(t, w, b):
        y = jax.lax.conv_general_dilated(
            t.astype(conv_dtype), w.astype(conv_dtype),
            window_strides=(1, 1), padding=((1, 1), (1, 1)),
            dimension_numbers=("NHWC", "HWIO", "NHWC"),
            preferred_element_type=jnp.float32)
        return y + b

    gp = conv3(bnrelu(g, params["g_bn"]), params["g_w"], params["g_b"])
    gp = jax.lax.reduce_window(gp, -jnp.inf, jax.lax.max,
                               (1, 2, 2, 1), (1, 2, 2, 1), "VALID")
    xc = conv3(bnrelu(x, params["x_bn"]), params["x_w"], params["x_b"])
    gc = conv3(bnrelu(gp + xc, params["gc_bn"]), params["gc_w"], params["gc_b"])
    out = gc * x
    return jnp.transpose(out, (0, 3, 1, 2))


if __name__ == "__main__":
    key = jax.random.PRNGKey(0)
    k_g, k_x, k_p = jax.random.split(key, 3)

    in_c = (8, 16)          # (g channels, x channels); out_c = in_c[1]
    B, H, W = 2, 8, 8       # x spatial; g spatial is 2x (consumed by MaxPool(2,2))

    g = jax.random.normal(k_g, (B, in_c[0], 2 * H, 2 * W), jnp.float32)
    x = jax.random.normal(k_x, (B, in_c[1], H, W), jnp.float32)
    params = init_params(k_p, in_c)

    # Exact-logic check: f32 matmuls vs the full-f32 reference (tight tolerance).
    out_f32 = jax.block_until_ready(
        attention_block_pallas(g, x, params, mm_dtype=jnp.float32))
    assert out_f32.shape == (B, in_c[1], H, W)
    ref_f32 = attention_block_ref(g, x, params, conv_dtype=jnp.float32)
    err_f32 = float(jnp.max(jnp.abs(out_f32 - ref_f32)))
    assert err_f32 < 1e-3, f"f32 kernel vs f32 reference: max abs err {err_f32}"

    # Performance configuration: bf16 MXU operands / f32 accumulation, checked
    # against a reference that mirrors the bf16 conv-input rounding.
    out_bf16 = jax.block_until_ready(attention_block_pallas(g, x, params))
    ref_bf16 = attention_block_ref(g, x, params, conv_dtype=jnp.bfloat16)
    err_bf16 = float(jnp.max(jnp.abs(out_bf16 - ref_bf16)))
    assert err_bf16 < 5e-2, f"bf16 kernel vs bf16 reference: max abs err {err_bf16}"

    print("KERNEL_OK")
</pallas_src>

<mosaic_0001>
module attributes {stable_mosaic.version = 11 : i64} {
  func.func @_attention_block_kernel(%arg0: i32, %arg1: memref<1x16x16x8xf32, #tpu.memory_space<vmem>>, %arg2: memref<1x8x8x16xf32, #tpu.memory_space<vmem>>, %arg3: memref<1x1x8xf32, #tpu.memory_space<vmem>>, %arg4: memref<1x1x8xf32, #tpu.memory_space<vmem>>, %arg5: memref<72x16xf32, #tpu.memory_space<vmem>>, %arg6: memref<1x1x16xf32, #tpu.memory_space<vmem>>, %arg7: memref<1x1x16xf32, #tpu.memory_space<vmem>>, %arg8: memref<144x16xf32, #tpu.memory_space<vmem>>, %arg9: memref<1x1x16xf32, #tpu.memory_space<vmem>>, %arg10: memref<1x1x16xf32, #tpu.memory_space<vmem>>, %arg11: memref<144x16xf32, #tpu.memory_space<vmem>>, %arg12: memref<1x16xf32, #tpu.memory_space<vmem>>, %arg13: memref<1x8x8x16xf32, #tpu.memory_space<vmem>>) attributes {dimension_semantics = [#tpu.dimension_semantics<parallel>], iteration_bounds = array<i64: 2>, scalar_prefetch = 0 : i64, scratch_operands = 0 : i64, tpu.core_type = #tpu.core_type<tc>, window_params = [{transform_indices = @transform_0, window_bounds = array<i64: 1, 16, 16, 8>}, {transform_indices = @transform_1, window_bounds = array<i64: 1, 8, 8, 16>}, {pipeline_mode = #tpu.pipeline_mode<synchronous>, transform_indices = @transform_2, window_bounds = array<i64: 1, 1, 8>}, {pipeline_mode = #tpu.pipeline_mode<synchronous>, transform_indices = @transform_3, window_bounds = array<i64: 1, 1, 8>}, {pipeline_mode = #tpu.pipeline_mode<synchronous>, transform_indices = @transform_4, window_bounds = array<i64: 72, 16>}, {pipeline_mode = #tpu.pipeline_mode<synchronous>, transform_indices = @transform_5, window_bounds = array<i64: 1, 1, 16>}, {pipeline_mode = #tpu.pipeline_mode<synchronous>, transform_indices = @transform_6, window_bounds = array<i64: 1, 1, 16>}, {pipeline_mode = #tpu.pipeline_mode<synchronous>, transform_indices = @transform_7, window_bounds = array<i64: 144, 16>}, {pipeline_mode = #tpu.pipeline_mode<synchronous>, transform_indices = @transform_8, window_bounds = array<i64: 1, 1, 16>}, {pipeline_mode = #tpu.pipeline_mode<synchronous>, transform_indices = @transform_9, window_bounds = array<i64: 1, 1, 16>}, {pipeline_mode = #tpu.pipeline_mode<synchronous>, transform_indices = @transform_10, window_bounds = array<i64: 144, 16>}, {pipeline_mode = #tpu.pipeline_mode<synchronous>, transform_indices = @transform_11, window_bounds = array<i64: 1, 16>}, {transform_indices = @transform_12, window_bounds = array<i64: 1, 8, 8, 16>}]} {
    %c0 = arith.constant 0 : index
    %c0_0 = arith.constant 0 : index
    %c0_1 = arith.constant 0 : index
    %c0_2 = arith.constant 0 : index
    %0 = vector.load %arg1[%c0, %c0_0, %c0_1, %c0_2] : memref<1x16x16x8xf32, #tpu.memory_space<vmem>>, vector<1x16x16x8xf32>
    %1 = vector.shape_cast %0 : vector<1x16x16x8xf32> to vector<16x16x8xf32>
    %c0_3 = arith.constant 0 : index
    %c0_4 = arith.constant 0 : index
    %c0_5 = arith.constant 0 : index
    %2 = vector.load %arg3[%c0_3, %c0_4, %c0_5] : memref<1x1x8xf32, #tpu.memory_space<vmem>>, vector<1x1x8xf32>
    %3 = vector.broadcast %2 : vector<1x1x8xf32> to vector<16x16x8xf32>
    %4 = arith.mulf %1, %3 : vector<16x16x8xf32>
    %c0_6 = arith.constant 0 : index
    %c0_7 = arith.constant 0 : index
    %c0_8 = arith.constant 0 : index
    %5 = vector.load %arg4[%c0_6, %c0_7, %c0_8] : memref<1x1x8xf32, #tpu.memory_space<vmem>>, vector<1x1x8xf32>
    %6 = vector.broadcast %5 : vector<1x1x8xf32> to vector<16x16x8xf32>
    %7 = arith.addf %4, %6 : vector<16x16x8xf32>
    %cst = arith.constant 0.000000e+00 : f32
    %8 = vector.broadcast %cst : f32 to vector<16x16x8xf32>
    %9 = arith.maximumf %7, %8 : vector<16x16x8xf32>
    %cst_9 = arith.constant 0.000000e+00 : f32
    %10 = vector.broadcast %cst_9 : f32 to vector<16x1x8xf32>
    %11 = vector.extract_strided_slice %9 {offsets = [0, 0, 0], sizes = [16, 15, 8], strides = [1, 1, 1]} : vector<16x16x8xf32> to vector<16x15x8xf32>
    %12 = tpu.concatenate %10, %11 in 1 : vector<16x1x8xf32>, vector<16x15x8xf32> -> vector<16x16x8xf32>
    %13 = vector.extract_strided_slice %9 {offsets = [0, 1, 0], sizes = [16, 15, 8], strides = [1, 1, 1]} : vector<16x16x8xf32> to vector<16x15x8xf32>
    %14 = tpu.concatenate %13, %10 in 1 : vector<16x15x8xf32>, vector<16x1x8xf32> -> vector<16x16x8xf32>
    %15 = tpu.concatenate %12, %9, %14 in 2 : vector<16x16x8xf32>, vector<16x16x8xf32>, vector<16x16x8xf32> -> vector<16x16x24xf32>
    %cst_10 = arith.constant 0.000000e+00 : f32
    %16 = vector.broadcast %cst_10 : f32 to vector<1x16x24xf32>
    %17 = vector.extract_strided_slice %15 {offsets = [0, 0, 0], sizes = [15, 16, 24], strides = [1, 1, 1]} : vector<16x16x24xf32> to vector<15x16x24xf32>
    %18 = tpu.concatenate %16, %17 in 0 : vector<1x16x24xf32>, vector<15x16x24xf32> -> vector<16x16x24xf32>
    %19 = vector.extract_strided_slice %15 {offsets = [1, 0, 0], sizes = [15, 16, 24], strides = [1, 1, 1]} : vector<16x16x24xf32> to vector<15x16x24xf32>
    %20 = tpu.concatenate %19, %16 in 0 : vector<15x16x24xf32>, vector<1x16x24xf32> -> vector<16x16x24xf32>
    %21 = tpu.concatenate %18, %15, %20 in 2 : vector<16x16x24xf32>, vector<16x16x24xf32>, vector<16x16x24xf32> -> vector<16x16x72xf32>
    %22 = vector.shape_cast %21 : vector<16x16x72xf32> to vector<256x72xf32>
    %c0_11 = arith.constant 0 : index
    %c0_12 = arith.constant 0 : index
    %23 = vector.load %arg5[%c0_11, %c0_12] : memref<72x16xf32, #tpu.memory_space<vmem>>, vector<72x16xf32>
    %cst_13 = arith.constant dense<0.000000e+00> : vector<256x16xf32>
    %24 = tpu.matmul %22, %23, %cst_13 {dimension_numbers = #tpu.dot_dimension_numbers<[1], [0], [0], [1], [0, 0, 1, 1], [], []>} : vector<256x72xf32>, vector<72x16xf32>, vector<256x16xf32> -> vector<256x16xf32>
    %25 = vector.shape_cast %24 : vector<256x16xf32> to vector<16x16x16xf32>
    %26 = vector.shape_cast %25 : vector<16x16x16xf32> to vector<8x2x16x16xf32>
    %cst_14 = arith.constant dense<0xFF800000> : vector<8x16x16xf32>
    %27 = vector.multi_reduction <maximumf>, %26, %cst_14 [1] : vector<8x2x16x16xf32> to vector<8x16x16xf32>
    %28 = tpu.transpose %27, [1, 0, 2] : vector<8x16x16xf32> -> vector<16x8x16xf32>
    %29 = vector.shape_cast %28 : vector<16x8x16xf32> to vector<8x2x8x16xf32>
    %cst_15 = arith.constant dense<0xFF800000> : vector<8x8x16xf32>
    %30 = vector.multi_reduction <maximumf>, %29, %cst_15 [1] : vector<8x2x8x16xf32> to vector<8x8x16xf32>
    %c0_16 = arith.constant 0 : index
    %c0_17 = arith.constant 0 : index
    %c0_18 = arith.constant 0 : index
    %c0_19 = arith.constant 0 : index
    %31 = vector.load %arg2[%c0_16, %c0_17, %c0_18, %c0_19] : memref<1x8x8x16xf32, #tpu.memory_space<vmem>>, vector<1x8x8x16xf32>
    %32 = vector.shape_cast %31 : vector<1x8x8x16xf32> to vector<8x8x16xf32>
    %c0_20 = arith.constant 0 : index
    %c0_21 = arith.constant 0 : index
    %c0_22 = arith.constant 0 : index
    %33 = vector.load %arg6[%c0_20, %c0_21, %c0_22] : memref<1x1x16xf32, #tpu.memory_space<vmem>>, vector<1x1x16xf32>
    %34 = vector.broadcast %33 : vector<1x1x16xf32> to vector<8x8x16xf32>
    %35 = arith.mulf %32, %34 : vector<8x8x16xf32>
    %c0_23 = arith.constant 0 : index
    %c0_24 = arith.constant 0 : index
    %c0_25 = arith.constant 0 : index
    %36 = vector.load %arg7[%c0_23, %c0_24, %c0_25] : memref<1x1x16xf32, #tpu.memory_space<vmem>>, vector<1x1x16xf32>
    %37 = vector.broadcast %36 : vector<1x1x16xf32> to vector<8x8x16xf32>
    %38 = arith.addf %35, %37 : vector<8x8x16xf32>
    %cst_26 = arith.constant 0.000000e+00 : f32
    %39 = vector.broadcast %cst_26 : f32 to vector<8x8x16xf32>
    %40 = arith.maximumf %38, %39 : vector<8x8x16xf32>
    %cst_27 = arith.constant 0.000000e+00 : f32
    %41 = vector.broadcast %cst_27 : f32 to vector<8x1x16xf32>
    %42 = vector.extract_strided_slice %40 {offsets = [0, 0, 0], sizes = [8, 7, 16], strides = [1, 1, 1]} : vector<8x8x16xf32> to vector<8x7x16xf32>
    %43 = tpu.concatenate %41, %42 in 1 : vector<8x1x16xf32>, vector<8x7x16xf32> -> vector<8x8x16xf32>
    %44 = vector.extract_strided_slice %40 {offsets = [0, 1, 0], sizes = [8, 7, 16], strides = [1, 1, 1]} : vector<8x8x16xf32> to vector<8x7x16xf32>
    %45 = tpu.concatenate %44, %41 in 1 : vector<8x7x16xf32>, vector<8x1x16xf32> -> vector<8x8x16xf32>
    %46 = tpu.concatenate %43, %40, %45 in 2 : vector<8x8x16xf32>, vector<8x8x16xf32>, vector<8x8x16xf32> -> vector<8x8x48xf32>
    %cst_28 = arith.constant 0.000000e+00 : f32
    %47 = vector.broadcast %cst_28 : f32 to vector<1x8x48xf32>
    %48 = vector.extract_strided_slice %46 {offsets = [0, 0, 0], sizes = [7, 8, 48], strides = [1, 1, 1]} : vector<8x8x48xf32> to vector<7x8x48xf32>
    %49 = tpu.concatenate %47, %48 in 0 : vector<1x8x48xf32>, vector<7x8x48xf32> -> vector<8x8x48xf32>
    %50 = vector.extract_strided_slice %46 {offsets = [1, 0, 0], sizes = [7, 8, 48], strides = [1, 1, 1]} : vector<8x8x48xf32> to vector<7x8x48xf32>
    %51 = tpu.concatenate %50, %47 in 0 : vector<7x8x48xf32>, vector<1x8x48xf32> -> vector<8x8x48xf32>
    %52 = tpu.concatenate %49, %46, %51 in 2 : vector<8x8x48xf32>, vector<8x8x48xf32>, vector<8x8x48xf32> -> vector<8x8x144xf32>
    %53 = vector.shape_cast %52 : vector<8x8x144xf32> to vector<64x144xf32>
    %c0_29 = arith.constant 0 : index
    %c0_30 = arith.constant 0 : index
    %54 = vector.load %arg8[%c0_29, %c0_30] : memref<144x16xf32, #tpu.memory_space<vmem>>, vector<144x16xf32>
    %cst_31 = arith.constant dense<0.000000e+00> : vector<64x16xf32>
    %55 = tpu.matmul %53, %54, %cst_31 {dimension_numbers = #tpu.dot_dimension_numbers<[1], [0], [0], [1], [0, 0, 1, 1], [], []>} : vector<64x144xf32>, vector<144x16xf32>, vector<64x16xf32> -> vector<64x16xf32>
    %56 = vector.shape_cast %55 : vector<64x16xf32> to vector<8x8x16xf32>
    %57 = arith.addf %30, %56 : vector<8x8x16xf32>
    %c0_32 = arith.constant 0 : index
    %c0_33 = arith.constant 0 : index
    %c0_34 = arith.constant 0 : index
    %58 = vector.load %arg9[%c0_32, %c0_33, %c0_34] : memref<1x1x16xf32, #tpu.memory_space<vmem>>, vector<1x1x16xf32>
    %59 = vector.broadcast %58 : vector<1x1x16xf32> to vector<8x8x16xf32>
    %60 = arith.mulf %57, %59 : vector<8x8x16xf32>
    %c0_35 = arith.constant 0 : index
    %c0_36 = arith.constant 0 : index
    %c0_37 = arith.constant 0 : index
    %61 = vector.load %arg10[%c0_35, %c0_36, %c0_37] : memref<1x1x16xf32, #tpu.memory_space<vmem>>, vector<1x1x16xf32>
    %62 = vector.broadcast %61 : vector<1x1x16xf32> to vector<8x8x16xf32>
    %63 = arith.addf %60, %62 : vector<8x8x16xf32>
    %cst_38 = arith.constant 0.000000e+00 : f32
    %64 = vector.broadcast %cst_38 : f32 to vector<8x8x16xf32>
    %65 = arith.maximumf %63, %64 : vector<8x8x16xf32>
    %cst_39 = arith.constant 0.000000e+00 : f32
    %66 = vector.broadcast %cst_39 : f32 to vector<8x1x16xf32>
    %67 = vector.extract_strided_slice %65 {offsets = [0, 0, 0], sizes = [8, 7, 16], strides = [1, 1, 1]} : vector<8x8x16xf32> to vector<8x7x16xf32>
    %68 = tpu.concatenate %66, %67 in 1 : vector<8x1x16xf32>, vector<8x7x16xf32> -> vector<8x8x16xf32>
    %69 = vector.extract_strided_slice %65 {offsets = [0, 1, 0], sizes = [8, 7, 16], strides = [1, 1, 1]} : vector<8x8x16xf32> to vector<8x7x16xf32>
    %70 = tpu.concatenate %69, %66 in 1 : vector<8x7x16xf32>, vector<8x1x16xf32> -> vector<8x8x16xf32>
    %71 = tpu.concatenate %68, %65, %70 in 2 : vector<8x8x16xf32>, vector<8x8x16xf32>, vector<8x8x16xf32> -> vector<8x8x48xf32>
    %cst_40 = arith.constant 0.000000e+00 : f32
    %72 = vector.broadcast %cst_40 : f32 to vector<1x8x48xf32>
    %73 = vector.extract_strided_slice %71 {offsets = [0, 0, 0], sizes = [7, 8, 48], strides = [1, 1, 1]} : vector<8x8x48xf32> to vector<7x8x48xf32>
    %74 = tpu.concatenate %72, %73 in 0 : vector<1x8x48xf32>, vector<7x8x48xf32> -> vector<8x8x48xf32>
    %75 = vector.extract_strided_slice %71 {offsets = [1, 0, 0], sizes = [7, 8, 48], strides = [1, 1, 1]} : vector<8x8x48xf32> to vector<7x8x48xf32>
    %76 = tpu.concatenate %75, %72 in 0 : vector<7x8x48xf32>, vector<1x8x48xf32> -> vector<8x8x48xf32>
    %77 = tpu.concatenate %74, %71, %76 in 2 : vector<8x8x48xf32>, vector<8x8x48xf32>, vector<8x8x48xf32> -> vector<8x8x144xf32>
    %78 = vector.shape_cast %77 : vector<8x8x144xf32> to vector<64x144xf32>
    %c0_41 = arith.constant 0 : index
    %c0_42 = arith.constant 0 : index
    %79 = vector.load %arg11[%c0_41, %c0_42] : memref<144x16xf32, #tpu.memory_space<vmem>>, vector<144x16xf32>
    %cst_43 = arith.constant dense<0.000000e+00> : vector<64x16xf32>
    %80 = tpu.matmul %78, %79, %cst_43 {dimension_numbers = #tpu.dot_dimension_numbers<[1], [0], [0], [1], [0, 0, 1, 1], [], []>} : vector<64x144xf32>, vector<144x16xf32>, vector<64x16xf32> -> vector<64x16xf32>
    %c0_44 = arith.constant 0 : index
    %c0_45 = arith.constant 0 : index
    %81 = vector.load %arg12[%c0_44, %c0_45] : memref<1x16xf32, #tpu.memory_space<vmem>>, vector<1x16xf32>
    %82 = vector.broadcast %81 : vector<1x16xf32> to vector<64x16xf32>
    %83 = arith.addf %80, %82 : vector<64x16xf32>
    %84 = vector.shape_cast %83 : vector<64x16xf32> to vector<8x8x16xf32>
    %85 = arith.mulf %84, %32 : vector<8x8x16xf32>
    %c0_46 = arith.constant 0 : index
    %c0_47 = arith.constant 0 : index
    %c0_48 = arith.constant 0 : index
    %c0_49 = arith.constant 0 : index
    %86 = vector.load %arg13[%c0_46, %c0_47, %c0_48, %c0_49] : memref<1x8x8x16xf32, #tpu.memory_space<vmem>>, vector<1x8x8x16xf32>
    %87 = vector.shape_cast %86 : vector<1x8x8x16xf32> to vector<8x8x16xf32>
    %88 = vector.shape_cast %85 : vector<8x8x16xf32> to vector<1x8x8x16xf32>
    tpu.vector_store %arg13[%c0_46, %c0_47, %c0_48, %c0_49], %88 {strides = array<i32>} : memref<1x8x8x16xf32, #tpu.memory_space<vmem>>, vector<1x8x8x16xf32>,
    return
  }
  func.func @transform_0(%arg0: i32) -> (i32, i32, i32, i32) {
    %c0_i32 = arith.constant 0 : i32
    %c0_i32_0 = arith.constant 0 : i32
    %c0_i32_1 = arith.constant 0 : i32
    %c0_i32_2 = arith.constant 0 : i32
    return %arg0, %c0_i32, %c0_i32_0, %c0_i32_1 : i32, i32, i32, i32
  }
  func.func @transform_1(%arg0: i32) -> (i32, i32, i32, i32) {
    %c0_i32 = arith.constant 0 : i32
    %c0_i32_0 = arith.constant 0 : i32
    %c0_i32_1 = arith.constant 0 : i32
    %c0_i32_2 = arith.constant 0 : i32
    return %arg0, %c0_i32, %c0_i32_0, %c0_i32_1 : i32, i32, i32, i32
  }
  func.func @transform_2(%arg0: i32) -> (i32, i32, i32) {
    %c0_i32 = arith.constant 0 : i32
    %c0_i32_0 = arith.constant 0 : i32
    %c0_i32_1 = arith.constant 0 : i32
    %c0_i32_2 = arith.constant 0 : i32
    return %c0_i32, %c0_i32_0, %c0_i32_1 : i32, i32, i32
  }
  func.func @transform_3(%arg0: i32) -> (i32, i32, i32) {
    %c0_i32 = arith.constant 0 : i32
    %c0_i32_0 = arith.constant 0 : i32
    %c0_i32_1 = arith.constant 0 : i32
    %c0_i32_2 = arith.constant 0 : i32
    return %c0_i32, %c0_i32_0, %c0_i32_1 : i32, i32, i32
  }
  func.func @transform_4(%arg0: i32) -> (i32, i32) {
    %c0_i32 = arith.constant 0 : i32
    %c0_i32_0 = arith.constant 0 : i32
    %c0_i32_1 = arith.constant 0 : i32
    return %c0_i32, %c0_i32_0 : i32, i32
  }
  func.func @transform_5(%arg0: i32) -> (i32, i32, i32) {
    %c0_i32 = arith.constant 0 : i32
    %c0_i32_0 = arith.constant 0 : i32
    %c0_i32_1 = arith.constant 0 : i32
    %c0_i32_2 = arith.constant 0 : i32
    return %c0_i32, %c0_i32_0, %c0_i32_1 : i32, i32, i32
  }
  func.func @transform_6(%arg0: i32) -> (i32, i32, i32) {
    %c0_i32 = arith.constant 0 : i32
    %c0_i32_0 = arith.constant 0 : i32
    %c0_i32_1 = arith.constant 0 : i32
    %c0_i32_2 = arith.constant 0 : i32
    return %c0_i32, %c0_i32_0, %c0_i32_1 : i32, i32, i32
  }
  func.func @transform_7(%arg0: i32) -> (i32, i32) {
    %c0_i32 = arith.constant 0 : i32
    %c0_i32_0 = arith.constant 0 : i32
    %c0_i32_1 = arith.constant 0 : i32
    return %c0_i32, %c0_i32_0 : i32, i32
  }
  func.func @transform_8(%arg0: i32) -> (i32, i32, i32) {
    %c0_i32 = arith.constant 0 : i32
    %c0_i32_0 = arith.constant 0 : i32
    %c0_i32_1 = arith.constant 0 : i32
    %c0_i32_2 = arith.constant 0 : i32
    return %c0_i32, %c0_i32_0, %c0_i32_1 : i32, i32, i32
  }
  func.func @transform_9(%arg0: i32) -> (i32, i32, i32) {
    %c0_i32 = arith.constant 0 : i32
    %c0_i32_0 = arith.constant 0 : i32
    %c0_i32_1 = arith.constant 0 : i32
    %c0_i32_2 = arith.constant 0 : i32
    return %c0_i32, %c0_i32_0, %c0_i32_1 : i32, i32, i32
  }
  func.func @transform_10(%arg0: i32) -> (i32, i32) {
    %c0_i32 = arith.constant 0 : i32
    %c0_i32_0 = arith.constant 0 : i32
    %c0_i32_1 = arith.constant 0 : i32
    return %c0_i32, %c0_i32_0 : i32, i32
  }
  func.func @transform_11(%arg0: i32) -> (i32, i32) {
    %c0_i32 = arith.constant 0 : i32
    %c0_i32_0 = arith.constant 0 : i32
    %c0_i32_1 = arith.constant 0 : i32
    return %c0_i32, %c0_i32_0 : i32, i32
  }
  func.func @transform_12(%arg0: i32) -> (i32, i32, i32, i32) {
    %c0_i32 = arith.constant 0 : i32
    %c0_i32_0 = arith.constant 0 : i32
    %c0_i32_1 = arith.constant 0 : i32
    %c0_i32_2 = arith.constant 0 : i32
    return %arg0, %c0_i32, %c0_i32_0, %c0_i32_1 : i32, i32, i32, i32
  }
}

</mosaic_0001>

<llo_original>
// kernel: tpu_custom_call.1
$region0: #{tpu_custom_call.1}
  #allocation0 [shape = 'u32[]', space=smem, size = 0x4, offset = 0x4, fixed_abs, tag = 'smem constant byte address 0x4 - core index']
  #allocation1 [shape = 'u32[72,128]{1,0:T(1,128)}', space=vmem, size = 0x9000, scoped, tag = 'internal scratch']
  %s0 = inlined_call_operand.vmem [shape: f32[2,16,16,8], index: 0, kind: input, shape index: {}]
  %s1 = inlined_call_operand.vmem [shape: f32[2,8,8,16], index: 1, kind: input, shape index: {}]
  %s2 = inlined_call_operand.vmem [shape: f32[1,1,8], index: 2, kind: input, shape index: {}]
  %s3 = inlined_call_operand.vmem [shape: f32[1,1,8], index: 3, kind: input, shape index: {}]
  %s4 = inlined_call_operand.vmem [shape: f32[72,16], index: 4, kind: input, shape index: {}]
  %s5 = inlined_call_operand.vmem [shape: f32[1,1,16], index: 5, kind: input, shape index: {}]
  %s6 = inlined_call_operand.vmem [shape: f32[1,1,16], index: 6, kind: input, shape index: {}]
  %s7 = inlined_call_operand.vmem [shape: f32[144,16], index: 7, kind: input, shape index: {}]
  %s8 = inlined_call_operand.vmem [shape: f32[1,1,16], index: 8, kind: input, shape index: {}]
  %s9 = inlined_call_operand.vmem [shape: f32[1,1,16], index: 9, kind: input, shape index: {}]
  %s10 = inlined_call_operand.vmem [shape: f32[144,16], index: 10, kind: input, shape index: {}]
  %s11 = inlined_call_operand.vmem [shape: f32[1,16], index: 11, kind: input, shape index: {}]
  %s12 = inlined_call_operand.hbm [shape: f32[2,8,8,16], index: 12, kind: output, shape index: {}]
  %s13 = sld [smem:[#allocation0]]
  $region81: #{tpu_custom_call.1} parent=0
    _
  %s15 = ssub.s32 1, %s13
  %s16 = scalar_select 0, %s15, %s13
  $region1: #{tpu_custom_call.1} parent=0
    #allocation2 [shape = 'u8[65536]{0}', space=vmem, size = 0x10000, scoped, tag = 'output window, operand 0']
    #allocation3 [shape = 's32[2]{0}', space=sflag, size = 0x8, scoped, tag = 'scoped memory for tpu_custom_call.1']
    %17 = vsyncpa [#allocation3], 0
    %s18 = scalar_lea.sflag [#allocation3], 1
    %19 = vsyncpa %s18, 0
    loop: start=0, step=1, limit=4
    $region2: #{tpu_custom_call.1} parent=1 // loop_pre_header
      _
    $region3: #{tpu_custom_call.1} parent=1 // loop_header
      %s21 = sphi 0, %s25
      %p22 = scmp.ge.s32.totalorder %s21, 4
      %s31 = sphi 0, %s33
      %s34 = sphi 0, %s31
      %s35 = sphi 0, %s34
      %s51 = sphi 0, %s35
      %s57 = sphi 0, %s59
      %s60 = sphi 0, %s57
      %s61 = sphi 0, %s60
      %s77 = sphi 0, %s61
      %s81 = sphi 0, %s81
      %s83 = sphi 0, %s81
      %s84 = sphi 0, %s83
      %s98 = sphi 0, %s84
      %s102 = sphi 0, %s102
      %s104 = sphi 0, %s102
      %s105 = sphi 0, %s104
      %s119 = sphi 0, %s105
      %s123 = sphi 0, %s123
      %s125 = sphi 0, %s123
      %s126 = sphi 0, %s125
      %s140 = sphi 0, %s126
      %s144 = sphi 0, %s144
      %s146 = sphi 0, %s144
      %s147 = sphi 0, %s146
      %s161 = sphi 0, %s147
      %s165 = sphi 0, %s165
      %s167 = sphi 0, %s165
      %s168 = sphi 0, %s167
      %s182 = sphi 0, %s168
      %s186 = sphi 0, %s186
      %s188 = sphi 0, %s186
      %s189 = sphi 0, %s188
      %s203 = sphi 0, %s189
      %s207 = sphi 0, %s207
      %s209 = sphi 0, %s207
      %s210 = sphi 0, %s209
      %s224 = sphi 0, %s210
      %s228 = sphi 0, %s228
      %s230 = sphi 0, %s228
      %s231 = sphi 0, %s230
      %s245 = sphi 0, %s231
      %s249 = sphi 0, %s249
      %s251 = sphi 0, %s249
      %s252 = sphi 0, %s251
      %s266 = sphi 0, %s252
      %s270 = sphi 0, %s270
      %s272 = sphi 0, %s270
      %s273 = sphi 0, %s272
      %s287 = sphi 0, %s273
      %s293 = sphi 0, %s295
      %s296 = sphi 0, %s293
      %s297 = sphi 0, %s296
      %s313 = sphi 0, %s297
    $region4: #{tpu_custom_call.1} parent=1 // loop_header_branch
      %24 = sbr.rel (%p22) target = $region8
    $region5: #{tpu_custom_call.1} parent=1 // loop_body
      %s26 = ssub.s32 %s21, 1
      %s27 = ssub.s32 %s21, 2
      %s28 = sadd.s32 %s21, 1
      %s29 = ssub.s32 %s21, %s28
      %p30 = scmp.eq.s32.totalorder %s29, 0
      %s32 = sadd.s32 %s31, 1
      %s33 = scalar_select %p30, %s31, %s32
      %p36 = pneg %p30
      %p37 = scmp.eq.s32.totalorder %s21, 1
      %p38 = por %p36, %p37
      %p39 = scmp.ne.s32.totalorder %s31, %s34
      %p40 = scmp.eq.s32.totalorder %s21, 0
      %p41 = por %p39, %p40
      %p42 = scmp.ne.s32.totalorder %s31, %s34
      %p43 = scmp.eq.s32.totalorder %s26, 1
      %p44 = por %p42, %p43
      %p45 = scmp.ne.s32.totalorder %s34, %s35
      %p46 = scmp.eq.s32.totalorder %s26, 0
      %p47 = por %p45, %p46
      %p48 = scmp.ne.s32.totalorder %s34, %s35
      %p49 = scmp.eq.s32.totalorder %s27, 1
      %p50 = por %p48, %p49
      %p52 = scmp.ne.s32.totalorder %s35, %s51
      %p53 = scmp.eq.s32.totalorder %s27, 0
      %p54 = por %p52, %p53
      %s55 = ssub.s32 %s21, %s28
      %p56 = scmp.eq.s32.totalorder %s55, 0
      %s58 = sadd.s32 %s57, 1
      %s59 = scalar_select %p56, %s57, %s58
      %p62 = pneg %p56
      %p63 = scmp.eq.s32.totalorder %s21, 1
      %p64 = por %p62, %p63
      %p65 = scmp.ne.s32.totalorder %s57, %s60
      %p66 = scmp.eq.s32.totalorder %s21, 0
      %p67 = por %p65, %p66
      %p68 = scmp.ne.s32.totalorder %s57, %s60
      %p69 = scmp.eq.s32.totalorder %s26, 1
      %p70 = por %p68, %p69
      %p71 = scmp.ne.s32.totalorder %s60, %s61
      %p72 = scmp.eq.s32.totalorder %s26, 0
      %p73 = por %p71, %p72
      %p74 = scmp.ne.s32.totalorder %s60, %s61
      %p75 = scmp.eq.s32.totalorder %s27, 1
      %p76 = por %p74, %p75
      %p78 = scmp.ne.s32.totalorder %s61, %s77
      %p79 = scmp.eq.s32.totalorder %s27, 0
      %p80 = por %p78, %p79
      %s82 = sadd.s32 %s81, 1
      %p85 = scmp.eq.s32.totalorder %s21, 1
      %p86 = scmp.ne.s32.totalorder %s81, %s83
      %p87 = scmp.eq.s32.totalorder %s21, 0
      %p88 = por %p86, %p87
      %p89 = scmp.ne.s32.totalorder %s81, %s83
      %p90 = scmp.eq.s32.totalorder %s26, 1
      %p91 = por %p89, %p90
      %p92 = scmp.ne.s32.totalorder %s83, %s84
      %p93 = scmp.eq.s32.totalorder %s26, 0
      %p94 = por %p92, %p93
      %p95 = scmp.ne.s32.totalorder %s83, %s84
      %p96 = scmp.eq.s32.totalorder %s27, 1
      %p97 = por %p95, %p96
      %p99 = scmp.ne.s32.totalorder %s84, %s98
      %p100 = scmp.eq.s32.totalorder %s27, 0
      %p101 = por %p99, %p100
      %s103 = sadd.s32 %s102, 1
      %p106 = scmp.eq.s32.totalorder %s21, 1
      %p107 = scmp.ne.s32.totalorder %s102, %s104
      %p108 = scmp.eq.s32.totalorder %s21, 0
      %p109 = por %p107, %p108
      %p110 = scmp.ne.s32.totalorder %s102, %s104
      %p111 = scmp.eq.s32.totalorder %s26, 1
      %p112 = por %p110, %p111
      %p113 = scmp.ne.s32.totalorder %s104, %s105
      %p114 = scmp.eq.s32.totalorder %s26, 0
      %p115 = por %p113, %p114
      %p116 = scmp.ne.s32.totalorder %s104, %s105
      %p117 = scmp.eq.s32.totalorder %s27, 1
      %p118 = por %p116, %p117
      %p120 = scmp.ne.s32.totalorder %s105, %s119
      %p121 = scmp.eq.s32.totalorder %s27, 0
      %p122 = por %p120, %p121
      %s124 = sadd.s32 %s123, 1
      %p127 = scmp.eq.s32.totalorder %s21, 1
      %p128 = scmp.ne.s32.totalorder %s123, %s125
      %p129 = scmp.eq.s32.totalorder %s21, 0
      %p130 = por %p128, %p129
      %p131 = scmp.ne.s32.totalorder %s123, %s125
      %p132 = scmp.eq.s32.totalorder %s26, 1
      %p133 = por %p131, %p132
      %p134 = scmp.ne.s32.totalorder %s125, %s126
      %p135 = scmp.eq.s32.totalorder %s26, 0
      %p136 = por %p134, %p135
      %p137 = scmp.ne.s32.totalorder %s125, %s126
      %p138 = scmp.eq.s32.totalorder %s27, 1
      %p139 = por %p137, %p138
      %p141 = scmp.ne.s32.totalorder %s126, %s140
      %p142 = scmp.eq.s32.totalorder %s27, 0
      %p143 = por %p141, %p142
      %s145 = sadd.s32 %s144, 1
      %p148 = scmp.eq.s32.totalorder %s21, 1
      %p149 = scmp.ne.s32.totalorder %s144, %s146
      %p150 = scmp.eq.s32.totalorder %s21, 0
      %p151 = por %p149, %p150
      %p152 = scmp.ne.s32.totalorder %s144, %s146
      %p153 = scmp.eq.s32.totalorder %s26, 1
      %p154 = por %p152, %p153
      %p155 = scmp.ne.s32.totalorder %s146, %s147
      %p156 = scmp.eq.s32.totalorder %s26, 0
      %p157 = por %p155, %p156
      %p158 = scmp.ne.s32.totalorder %s146, %s147
      %p159 = scmp.eq.s32.totalorder %s27, 1
      %p160 = por %p158, %p159
      %p162 = scmp.ne.s32.totalorder %s147, %s161
      %p163 = scmp.eq.s32.totalorder %s27, 0
      %p164 = por %p162, %p163
      %s166 = sadd.s32 %s165, 1
      %p169 = scmp.eq.s32.totalorder %s21, 1
      %p170 = scmp.ne.s32.totalorder %s165, %s167
      %p171 = scmp.eq.s32.totalorder %s21, 0
      %p172 = por %p170, %p171
      %p173 = scmp.ne.s32.totalorder %s165, %s167
      %p174 = scmp.eq.s32.totalorder %s26, 1
      %p175 = por %p173, %p174
      %p176 = scmp.ne.s32.totalorder %s167, %s168
      %p177 = scmp.eq.s32.totalorder %s26, 0
      %p178 = por %p176, %p177
      %p179 = scmp.ne.s32.totalorder %s167, %s168
      %p180 = scmp.eq.s32.totalorder %s27, 1
      %p181 = por %p179, %p180
      %p183 = scmp.ne.s32.totalorder %s168, %s182
      %p184 = scmp.eq.s32.totalorder %s27, 0
      %p185 = por %p183, %p184
      %s187 = sadd.s32 %s186, 1
      %p190 = scmp.eq.s32.totalorder %s21, 1
      %p191 = scmp.ne.s32.totalorder %s186, %s188
      %p192 = scmp.eq.s32.totalorder %s21, 0
      %p193 = por %p191, %p192
      %p194 = scmp.ne.s32.totalorder %s186, %s188
      %p195 = scmp.eq.s32.totalorder %s26, 1
      %p196 = por %p194, %p195
      %p197 = scmp.ne.s32.totalorder %s188, %s189
      %p198 = scmp.eq.s32.totalorder %s26, 0
      %p199 = por %p197, %p198
      %p200 = scmp.ne.s32.totalorder %s188, %s189
      %p201 = scmp.eq.s32.totalorder %s27, 1
      %p202 = por %p200, %p201
      %p204 = scmp.ne.s32.totalorder %s189, %s203
      %p205 = scmp.eq.s32.totalorder %s27, 0
      %p206 = por %p204, %p205
      %s208 = sadd.s32 %s207, 1
      %p211 = scmp.eq.s32.totalorder %s21, 1
      %p212 = scmp.ne.s32.totalorder %s207, %s209
      %p213 = scmp.eq.s32.totalorder %s21, 0
      %p214 = por %p212, %p213
      %p215 = scmp.ne.s32.totalorder %s207, %s209
      %p216 = scmp.eq.s32.totalorder %s26, 1
      %p217 = por %p215, %p216
      %p218 = scmp.ne.s32.totalorder %s209, %s210
      %p219 = scmp.eq.s32.totalorder %s26, 0
      %p220 = por %p218, %p219
      %p221 = scmp.ne.s32.totalorder %s209, %s210
      %p222 = scmp.eq.s32.totalorder %s27, 1
      %p223 = por %p221, %p222
      %p225 = scmp.ne.s32.totalorder %s210, %s224
      %p226 = scmp.eq.s32.totalorder %s27, 0
      %p227 = por %p225, %p226
      %s229 = sadd.s32 %s228, 1
      %p232 = scmp.eq.s32.totalorder %s21, 1
      %p233 = scmp.ne.s32.totalorder %s228, %s230
      %p234 = scmp.eq.s32.totalorder %s21, 0
      %p235 = por %p233, %p234
      %p236 = scmp.ne.s32.totalorder %s228, %s230
      %p237 = scmp.eq.s32.totalorder %s26, 1
      %p238 = por %p236, %p237
      %p239 = scmp.ne.s32.totalorder %s230, %s231
      %p240 = scmp.eq.s32.totalorder %s26, 0
      %p241 = por %p239, %p240
      %p242 = scmp.ne.s32.totalorder %s230, %s231
      %p243 = scmp.eq.s32.totalorder %s27, 1
      %p244 = por %p242, %p243
      %p246 = scmp.ne.s32.totalorder %s231, %s245
      %p247 = scmp.eq.s32.totalorder %s27, 0
      %p248 = por %p246, %p247
      %s250 = sadd.s32 %s249, 1
      %p253 = scmp.eq.s32.totalorder %s21, 1
      %p254 = scmp.ne.s32.totalorder %s249, %s251
      %p255 = scmp.eq.s32.totalorder %s21, 0
      %p256 = por %p254, %p255
      %p257 = scmp.ne.s32.totalorder %s249, %s251
      %p258 = scmp.eq.s32.totalorder %s26, 1
      %p259 = por %p257, %p258
      %p260 = scmp.ne.s32.totalorder %s251, %s252
      %p261 = scmp.eq.s32.totalorder %s26, 0
      %p262 = por %p260, %p261
      %p263 = scmp.ne.s32.totalorder %s251, %s252
      %p264 = scmp.eq.s32.totalorder %s27, 1
      %p265 = por %p263, %p264
      %p267 = scmp.ne.s32.totalorder %s252, %s266
      %p268 = scmp.eq.s32.totalorder %s27, 0
      %p269 = por %p267, %p268
      %s271 = sadd.s32 %s270, 1
      %p274 = scmp.eq.s32.totalorder %s21, 1
      %p275 = scmp.ne.s32.totalorder %s270, %s272
      %p276 = scmp.eq.s32.totalorder %s21, 0
      %p277 = por %p275, %p276
      %p278 = scmp.ne.s32.totalorder %s270, %s272
      %p279 = scmp.eq.s32.totalorder %s26, 1
      %p280 = por %p278, %p279
      %p281 = scmp.ne.s32.totalorder %s272, %s273
      %p282 = scmp.eq.s32.totalorder %s26, 0
      %p283 = por %p281, %p282
      %p284 = scmp.ne.s32.totalorder %s272, %s273
      %p285 = scmp.eq.s32.totalorder %s27, 1
      %p286 = por %p284, %p285
      %p288 = scmp.ne.s32.totalorder %s273, %s287
      %p289 = scmp.eq.s32.totalorder %s27, 0
      %p290 = por %p288, %p289
      %s291 = ssub.s32 %s21, %s28
      %p292 = scmp.eq.s32.totalorder %s291, 0
      %s294 = sadd.s32 %s293, 1
      %s295 = scalar_select %p292, %s293, %s294
      %p298 = pneg %p292
      %p299 = scmp.eq.s32.totalorder %s21, 1
      %p300 = por %p298, %p299
      %p301 = scmp.ne.s32.totalorder %s293, %s296
      %p302 = scmp.eq.s32.totalorder %s21, 0
      %p303 = por %p301, %p302
      %p304 = scmp.ne.s32.totalorder %s293, %s296
      %p305 = scmp.eq.s32.totalorder %s26, 1
      %p306 = por %p304, %p305
      %p307 = scmp.ne.s32.totalorder %s296, %s297
      %p308 = scmp.eq.s32.totalorder %s26, 0
      %p309 = por %p307, %p308
      %p310 = scmp.ne.s32.totalorder %s296, %s297
      %p311 = scmp.eq.s32.totalorder %s27, 1
      %p312 = por %p310, %p311
      %p314 = scmp.ne.s32.totalorder %s297, %s313
      %p315 = scmp.eq.s32.totalorder %s27, 0
      %p316 = por %p314, %p315
      %p317 = scmp.le.s32.totalorder 1, %s21
      %p318 = scmp.lt.s32.totalorder %s21, 3
      %p319 = pnand %p317, %p318
      %p320 = pneg %p319
      // Predicated region
      $region9: #{tpu_custom_call.1} parent=5 // pred_check
        _
      $region10: #{tpu_custom_call.1} parent=5 // pred_check_branch
        %322 = sbr.rel (%p319) target = $region12
      $region11: #{tpu_custom_call.1} parent=5 // pred_region
        %s323 = ssub.s32 %s21, 1
        // Predicated region
        $region13: #{tpu_custom_call.1} parent=11 // pred_check
          %p324 = pneg %p94
        $region14: #{tpu_custom_call.1} parent=11 // pred_check_branch
          %326 = sbr.rel (%p324) target = $region16
        $region15: #{tpu_custom_call.1} parent=11 // pred_region
          _
        $region16: #{tpu_custom_call.1} parent=11 // pred_fallthru
          _
        // Predicated region
        $region17: #{tpu_custom_call.1} parent=11 // pred_check
          %p327 = pneg %p115
        $region18: #{tpu_custom_call.1} parent=11 // pred_check_branch
          %329 = sbr.rel (%p327) target = $region20
        $region19: #{tpu_custom_call.1} parent=11 // pred_region
          _
        $region20: #{tpu_custom_call.1} parent=11 // pred_fallthru
          _
        // Predicated region
        $region21: #{tpu_custom_call.1} parent=11 // pred_check
          %p330 = pneg %p136
        $region22: #{tpu_custom_call.1} parent=11 // pred_check_branch
          %332 = sbr.rel (%p330) target = $region24
        $region23: #{tpu_custom_call.1} parent=11 // pred_region
          _
        $region24: #{tpu_custom_call.1} parent=11 // pred_fallthru
          _
        // Predicated region
        $region25: #{tpu_custom_call.1} parent=11 // pred_check
          %p333 = pneg %p157
        $region26: #{tpu_custom_call.1} parent=11 // pred_check_branch
          %335 = sbr.rel (%p333) target = $region28
        $region27: #{tpu_custom_call.1} parent=11 // pred_region
          _
        $region28: #{tpu_custom_call.1} parent=11 // pred_fallthru
          _
        // Predicated region
        $region29: #{tpu_custom_call.1} parent=11 // pred_check
          %p336 = pneg %p178
        $region30: #{tpu_custom_call.1} parent=11 // pred_check_branch
          %338 = sbr.rel (%p336) target = $region32
        $region31: #{tpu_custom_call.1} parent=11 // pred_region
          _
        $region32: #{tpu_custom_call.1} parent=11 // pred_fallthru
          _
        // Predicated region
        $region33: #{tpu_custom_call.1} parent=11 // pred_check
          %p339 = pneg %p199
        $region34: #{tpu_custom_call.1} parent=11 // pred_check_branch
          %341 = sbr.rel (%p339) target = $region36
        $region35: #{tpu_custom_call.1} parent=11 // pred_region
          _
        $region36: #{tpu_custom_call.1} parent=11 // pred_fallthru
          _
        // Predicated region
        $region37: #{tpu_custom_call.1} parent=11 // pred_check
          %p342 = pneg %p220
        $region38: #{tpu_custom_call.1} parent=11 // pred_check_branch
          %344 = sbr.rel (%p342) target = $region40
        $region39: #{tpu_custom_call.1} parent=11 // pred_region
          _
        $region40: #{tpu_custom_call.1} parent=11 // pred_fallthru
          _
        // Predicated region
        $region41: #{tpu_custom_call.1} parent=11 // pred_check
          %p345 = pneg %p241
        $region42: #{tpu_custom_call.1} parent=11 // pred_check_branch
          %347 = sbr.rel (%p345) target = $region44
        $region43: #{tpu_custom_call.1} parent=11 // pred_region
          _
        $region44: #{tpu_custom_call.1} parent=11 // pred_fallthru
          _
        // Predicated region
        $region45: #{tpu_custom_call.1} parent=11 // pred_check
          %p348 = pneg %p262
        $region46: #{tpu_custom_call.1} parent=11 // pred_check_branch
          %350 = sbr.rel (%p348) target = $region48
        $region47: #{tpu_custom_call.1} parent=11 // pred_region
          _
        $region48: #{tpu_custom_call.1} parent=11 // pred_fallthru
          _
        // Predicated region
        $region49: #{tpu_custom_call.1} parent=11 // pred_check
          %p351 = pneg %p283
        $region50: #{tpu_custom_call.1} parent=11 // pred_check_branch
          %353 = sbr.rel (%p351) target = $region52
        $region51: #{tpu_custom_call.1} parent=11 // pred_region
          _
        $region52: #{tpu_custom_call.1} parent=11 // pred_fallthru
          _
      $region12: #{tpu_custom_call.1} parent=5 // pred_fallthru
        _
      %p354 = scmp.lt.s32.totalorder %s21, 2
      // Predicated region
      $region53: #{tpu_custom_call.1} parent=5 // pred_check
        %p355 = pneg %p354
      $region54: #{tpu_custom_call.1} parent=5 // pred_check_branch
        %357 = sbr.rel (%p355) target = $region56
      $region55: #{tpu_custom_call.1} parent=5 // pred_region
        // Predicated region
        $region57: #{tpu_custom_call.1} parent=55 // pred_check
          %p358 = pneg %p41
        $region58: #{tpu_custom_call.1} parent=55 // pred_check_branch
          %360 = sbr.rel (%p358) target = $region60
        $region59: #{tpu_custom_call.1} parent=55 // pred_region
          %p361 = scmp.lt.s32.totalorder %s21, 1
          %s362 = scalar_select %p361, %s21, 1
          %s363 = smul.addr %s362, 32
          %s364 = smul.addr %s363, 8
          %s365 = scalar_lea.vmem %s0, %s364
        $region60: #{tpu_custom_call.1} parent=55 // pred_fallthru
          _
        // Predicated region
        $region61: #{tpu_custom_call.1} parent=55 // pred_check
          %p366 = pneg %p67
        $region62: #{tpu_custom_call.1} parent=55 // pred_check_branch
          %368 = sbr.rel (%p366) target = $region64
        $region63: #{tpu_custom_call.1} parent=55 // pred_region
          %p369 = scmp.lt.s32.totalorder %s21, 1
          %s370 = scalar_select %p369, %s21, 1
          %s371 = smul.addr %s370, 8
          %s372 = smul.addr %s371, 8
          %s373 = scalar_lea.vmem %s1, %s372
        $region64: #{tpu_custom_call.1} parent=55 // pred_fallthru
          _
      $region56: #{tpu_custom_call.1} parent=5 // pred_fallthru
        _
      %p374 = scmp.le.s32.totalorder 1, %s21
      %p375 = scmp.lt.s32.totalorder %s21, 3
      %p376 = pnand %p374, %p375
      %p377 = pneg %p376
      // Predicated region
      $region65: #{tpu_custom_call.1} parent=5 // pred_check
        _
      $region66: #{tpu_custom_call.1} parent=5 // pred_check_branch
        %379 = sbr.rel (%p376) target = $region68
      $region67: #{tpu_custom_call.1} parent=5 // pred_region
        %s380 = ssub.s32 %s21, 1
        %p381 = scmp.lt.s32.totalorder %s26, 1
        %s382 = scalar_select %p381, %s26, 1
        %s383 = smul.addr %s382, 32
        %s384 = smul.addr %s383, 8
        %s385 = scalar_lea.vmem %s0, %s384
        %p386 = pneg %p47
        %p387 = pneg %p44
        %p388 = scmp.lt.s32.totalorder %s26, 1
        %s389 = scalar_select %p388, %s26, 1
        %s390 = smul.addr %s389, 8
        %s391 = smul.addr %s390, 8
        %s392 = scalar_lea.vmem %s1, %s391
        %p393 = pneg %p73
        %p394 = pneg %p70
        %p395 = pneg %p94
        %p396 = pneg %p91
        %p397 = pneg %p115
        %p398 = pneg %p112
        %p399 = pneg %p136
        %p400 = pneg %p133
        %p401 = pneg %p157
        %p402 = pneg %p154
        %p403 = pneg %p178
        %p404 = pneg %p175
        %p405 = pneg %p199
        %p406 = pneg %p196
        %p407 = pneg %p220
        %p408 = pneg %p217
        %p409 = pneg %p241
        %p410 = pneg %p238
        %p411 = pneg %p262
        %p412 = pneg %p259
        %p413 = pneg %p283
        %p414 = pneg %p280
        %p415 = pneg %p309
        %p416 = pneg %p306
        %s417 = sand.u32 %s296, 1
        %s418 = scalar_lea.sflag [#allocation3], %s417
        %s419 = sand.u32 %s296, 1
        %s420 = smul.addr %s419, 64
        %s421 = scalar_lea.vmem [#allocation2], %s420
        %p422 = scmp.lt.s32.totalorder %s26, 1
        %s423 = scalar_select %p422, %s26, 1
        %s424 = smul.addr %s423, 32
        %s425 = smul.addr %s424, 8
        %s426 = scalar_lea.vmem %s0, %s425
        %p427 = scmp.lt.s32.totalorder %s26, 1
        %s428 = scalar_select %p427, %s26, 1
        %s429 = smul.addr %s428, 8
        %s430 = smul.addr %s429, 8
        %s431 = scalar_lea.vmem %s1, %s430
        %v432 = vld [vmem:[%s426] sm:$0xff]
        %v433 = vld [vmem:[%s426 + $0x8] sm:$0xff]
        %v434 = vld [vmem:[%s426 + $0x10] sm:$0xff]
        %v435 = vld [vmem:[%s426 + $0x18] sm:$0xff]
        %v436 = vld [vmem:[%s426 + $0x20] sm:$0xff]
        %v437 = vld [vmem:[%s426 + $0x28] sm:$0xff]
        %v438 = vld [vmem:[%s426 + $0x30] sm:$0xff]
        %v439 = vld [vmem:[%s426 + $0x38] sm:$0xff]
        %v440 = vld [vmem:[%s426 + $0x40] sm:$0xff]
        %v441 = vld [vmem:[%s426 + $0x48] sm:$0xff]
        %v442 = vld [vmem:[%s426 + $0x50] sm:$0xff]
        %v443 = vld [vmem:[%s426 + $0x58] sm:$0xff]
        %v444 = vld [vmem:[%s426 + $0x60] sm:$0xff]
        %v445 = vld [vmem:[%s426 + $0x68] sm:$0xff]
        %v446 = vld [vmem:[%s426 + $0x70] sm:$0xff]
        %v447 = vld [vmem:[%s426 + $0x78] sm:$0xff]
        %v448 = vld [vmem:[%s426 + $0x80] sm:$0xff]
        %v449 = vld [vmem:[%s426 + $0x88] sm:$0xff]
        %v450 = vld [vmem:[%s426 + $0x90] sm:$0xff]
        %v451 = vld [vmem:[%s426 + $0x98] sm:$0xff]
        %v452 = vld [vmem:[%s426 + $0xa0] sm:$0xff]
        %v453 = vld [vmem:[%s426 + $0xa8] sm:$0xff]
        %v454 = vld [vmem:[%s426 + $0xb0] sm:$0xff]
        %v455 = vld [vmem:[%s426 + $0xb8] sm:$0xff]
        %v456 = vld [vmem:[%s426 + $0xc0] sm:$0xff]
        %v457 = vld [vmem:[%s426 + $0xc8] sm:$0xff]
        %v458 = vld [vmem:[%s426 + $0xd0] sm:$0xff]
        %v459 = vld [vmem:[%s426 + $0xd8] sm:$0xff]
        %v460 = vld [vmem:[%s426 + $0xe0] sm:$0xff]
        %v461 = vld [vmem:[%s426 + $0xe8] sm:$0xff]
        %v462 = vld [vmem:[%s426 + $0xf0] sm:$0xff]
        %v463 = vld [vmem:[%s426 + $0xf8] sm:$0xff]
        %v464 = vld [vmem:[%s2] sm:$0x1]
        %v466 = vperm.slane %v464, 0
        %v468 = vmul.f32 %v432, %v466
        %v469 = vmul.f32 %v433, %v466
        %v470 = vmul.f32 %v434, %v466
        %v471 = vmul.f32 %v435, %v466
        %v472 = vmul.f32 %v436, %v466
        %v473 = vmul.f32 %v437, %v466
        %v474 = vmul.f32 %v438, %v466
        %v475 = vmul.f32 %v439, %v466
        %v476 = vmul.f32 %v440, %v466
        %v477 = vmul.f32 %v441, %v466
        %v478 = vmul.f32 %v442, %v466
        %v479 = vmul.f32 %v443, %v466
        %v480 = vmul.f32 %v444, %v466
        %v481 = vmul.f32 %v445, %v466
        %v482 = vmul.f32 %v446, %v466
        %v483 = vmul.f32 %v447, %v466
        %v484 = vmul.f32 %v448, %v466
        %v485 = vmul.f32 %v449, %v466
        %v486 = vmul.f32 %v450, %v466
        %v487 = vmul.f32 %v451, %v466
        %v488 = vmul.f32 %v452, %v466
        %v489 = vmul.f32 %v453, %v466
        %v490 = vmul.f32 %v454, %v466
        %v491 = vmul.f32 %v455, %v466
        %v492 = vmul.f32 %v456, %v466
        %v493 = vmul.f32 %v457, %v466
        %v494 = vmul.f32 %v458, %v466
        %v495 = vmul.f32 %v459, %v466
        %v496 = vmul.f32 %v460, %v466
        %v497 = vmul.f32 %v461, %v466
        %v498 = vmul.f32 %v462, %v466
        %v499 = vmul.f32 %v463, %v466
        %v500 = vld [vmem:[%s3] sm:$0x1]
        %v502 = vperm.slane %v500, 0
        %v504 = vadd.f32 %v468, %v502
        %v505 = vadd.f32 %v469, %v502
        %v506 = vadd.f32 %v470, %v502
        %v507 = vadd.f32 %v471, %v502
        %v508 = vadd.f32 %v472, %v502
        %v509 = vadd.f32 %v473, %v502
        %v510 = vadd.f32 %v474, %v502
        %v511 = vadd.f32 %v475, %v502
        %v512 = vadd.f32 %v476, %v502
        %v513 = vadd.f32 %v477, %v502
        %v514 = vadd.f32 %v478, %v502
        %v515 = vadd.f32 %v479, %v502
        %v516 = vadd.f32 %v480, %v502
        %v517 = vadd.f32 %v481, %v502
        %v518 = vadd.f32 %v482, %v502
        %v519 = vadd.f32 %v483, %v502
        %v520 = vadd.f32 %v484, %v502
        %v521 = vadd.f32 %v485, %v502
        %v522 = vadd.f32 %v486, %v502
        %v523 = vadd.f32 %v487, %v502
        %v524 = vadd.f32 %v488, %v502
        %v525 = vadd.f32 %v489, %v502
        %v526 = vadd.f32 %v490, %v502
        %v527 = vadd.f32 %v491, %v502
        %v528 = vadd.f32 %v492, %v502
        %v529 = vadd.f32 %v493, %v502
        %v530 = vadd.f32 %v494, %v502
        %v531 = vadd.f32 %v495, %v502
        %v532 = vadd.f32 %v496, %v502
        %v533 = vadd.f32 %v497, %v502
        %v534 = vadd.f32 %v498, %v502
        %v535 = vadd.f32 %v499, %v502
        %v536 = vmax.f32 %v504, 0.0
        %v537 = vmax.f32 %v505, 0.0
        %v538 = vmax.f32 %v506, 0.0
        %v539 = vmax.f32 %v507, 0.0
        %v540 = vmax.f32 %v508, 0.0
        %v541 = vmax.f32 %v509, 0.0
        %v542 = vmax.f32 %v510, 0.0
        %v543 = vmax.f32 %v511, 0.0
        %v544 = vmax.f32 %v512, 0.0
        %v545 = vmax.f32 %v513, 0.0
        %v546 = vmax.f32 %v514, 0.0
        %v547 = vmax.f32 %v515, 0.0
        %v548 = vmax.f32 %v516, 0.0
        %v549 = vmax.f32 %v517, 0.0
        %v550 = vmax.f32 %v518, 0.0
        %v551 = vmax.f32 %v519, 0.0
        %v552 = vmax.f32 %v520, 0.0
        %v553 = vmax.f32 %v521, 0.0
        %v554 = vmax.f32 %v522, 0.0
        %v555 = vmax.f32 %v523, 0.0
        %v556 = vmax.f32 %v524, 0.0
        %v557 = vmax.f32 %v525, 0.0
        %v558 = vmax.f32 %v526, 0.0
        %v559 = vmax.f32 %v527, 0.0
        %v560 = vmax.f32 %v528, 0.0
        %v561 = vmax.f32 %v529, 0.0
        %v562 = vmax.f32 %v530, 0.0
        %v563 = vmax.f32 %v531, 0.0
        %v564 = vmax.f32 %v532, 0.0
        %v565 = vmax.f32 %v533, 0.0
        %v566 = vmax.f32 %v534, 0.0
        %v567 = vmax.f32 %v535, 0.0
        %vm600 = vcmask 1040384
        %v601 = vrot.slane %v536, 7
        %v602 = vrot.slane %v537, 7
        %v603 = vsel %vm600, %v601, %v602
        %v604 = vrot.slane %v538, 7
        %v605 = vrot.slane %v539, 7
        %v606 = vsel %vm600, %v604, %v605
        %v607 = vrot.slane %v540, 7
        %v608 = vrot.slane %v541, 7
        %v609 = vsel %vm600, %v607, %v608
        %v610 = vrot.slane %v542, 7
        %v611 = vrot.slane %v543, 7
        %v612 = vsel %vm600, %v610, %v611
        %v613 = vrot.slane %v544, 7
        %v614 = vrot.slane %v545, 7
        %v615 = vsel %vm600, %v613, %v614
        %v616 = vrot.slane %v546, 7
        %v617 = vrot.slane %v547, 7
        %v618 = vsel %vm600, %v616, %v617
        %v619 = vrot.slane %v548, 7
        %v620 = vrot.slane %v549, 7
        %v621 = vsel %vm600, %v619, %v620
        %v622 = vrot.slane %v550, 7
        %v623 = vrot.slane %v551, 7
        %v624 = vsel %vm600, %v622, %v623
        %v625 = vrot.slane %v552, 7
        %v626 = vrot.slane %v553, 7
        %v627 = vsel %vm600, %v625, %v626
        %v628 = vrot.slane %v554, 7
        %v629 = vrot.slane %v555, 7
        %v630 = vsel %vm600, %v628, %v629
        %v631 = vrot.slane %v556, 7
        %v632 = vrot.slane %v557, 7
        %v633 = vsel %vm600, %v631, %v632
        %v634 = vrot.slane %v558, 7
        %v635 = vrot.slane %v559, 7
        %v636 = vsel %vm600, %v634, %v635
        %v637 = vrot.slane %v560, 7
        %v638 = vrot.slane %v561, 7
        %v639 = vsel %vm600, %v637, %v638
        %v640 = vrot.slane %v562, 7
        %v641 = vrot.slane %v563, 7
        %v642 = vsel %vm600, %v640, %v641
        %v643 = vrot.slane %v564, 7
        %v644 = vrot.slane %v565, 7
        %v645 = vsel %vm600, %v643, %v644
        %v646 = vrot.slane %v566, 7
        %v647 = vrot.slane %v567, 7
        %v648 = vsel %vm600, %v646, %v647
        %v681 = vsel %vm600, 0.0, %v601
        %v682 = vsel %vm600, 0.0, %v604
        %v683 = vsel %vm600, 0.0, %v607
        %v684 = vsel %vm600, 0.0, %v610
        %v685 = vsel %vm600, 0.0, %v613
        %v686 = vsel %vm600, 0.0, %v616
        %v687 = vsel %vm600, 0.0, %v619
        %v688 = vsel %vm600, 0.0, %v622
        %v689 = vsel %vm600, 0.0, %v625
        %v690 = vsel %vm600, 0.0, %v628
        %v691 = vsel %vm600, 0.0, %v631
        %v692 = vsel %vm600, 0.0, %v634
        %v693 = vsel %vm600, 0.0, %v637
        %v694 = vsel %vm600, 0.0, %v640
        %v695 = vsel %vm600, 0.0, %v643
        %v696 = vsel %vm600, 0.0, %v646
        %vm697 = vcmask 1046528
        %v698 = vrot.slane %v536, 1
        %v699 = vrot.slane %v537, 1
        %v700 = vsel %vm697, %v698, %v699
        %v701 = vrot.slane %v538, 1
        %v702 = vrot.slane %v539, 1
        %v703 = vsel %vm697, %v701, %v702
        %v704 = vrot.slane %v540, 1
        %v705 = vrot.slane %v541, 1
        %v706 = vsel %vm697, %v704, %v705
        %v707 = vrot.slane %v542, 1
        %v708 = vrot.slane %v543, 1
        %v709 = vsel %vm697, %v707, %v708
        %v710 = vrot.slane %v544, 1
        %v711 = vrot.slane %v545, 1
        %v712 = vsel %vm697, %v710, %v711
        %v713 = vrot.slane %v546, 1
        %v714 = vrot.slane %v547, 1
        %v715 = vsel %vm697, %v713, %v714
        %v716 = vrot.slane %v548, 1
        %v717 = vrot.slane %v549, 1
        %v718 = vsel %vm697, %v716, %v717
        %v719 = vrot.slane %v550, 1
        %v720 = vrot.slane %v551, 1
        %v721 = vsel %vm697, %v719, %v720
        %v722 = vrot.slane %v552, 1
        %v723 = vrot.slane %v553, 1
        %v724 = vsel %vm697, %v722, %v723
        %v725 = vrot.slane %v554, 1
        %v726 = vrot.slane %v555, 1
        %v727 = vsel %vm697, %v725, %v726
        %v728 = vrot.slane %v556, 1
        %v729 = vrot.slane %v557, 1
        %v730 = vsel %vm697, %v728, %v729
        %v731 = vrot.slane %v558, 1
        %v732 = vrot.slane %v559, 1
        %v733 = vsel %vm697, %v731, %v732
        %v734 = vrot.slane %v560, 1
        %v735 = vrot.slane %v561, 1
        %v736 = vsel %vm697, %v734, %v735
        %v737 = vrot.slane %v562, 1
        %v738 = vrot.slane %v563, 1
        %v739 = vsel %vm697, %v737, %v738
        %v740 = vrot.slane %v564, 1
        %v741 = vrot.slane %v565, 1
        %v742 = vsel %vm697, %v740, %v741
        %v743 = vrot.slane %v566, 1
        %v744 = vrot.slane %v567, 1
        %v745 = vsel %vm697, %v743, %v744
        %v762 = vsel %vm697, %v699, 0.0
        %v763 = vsel %vm697, %v702, 0.0
        %v764 = vsel %vm697, %v705, 0.0
        %v765 = vsel %vm697, %v708, 0.0
        %v766 = vsel %vm697, %v711, 0.0
        %v767 = vsel %vm697, %v714, 0.0
        %v768 = vsel %vm697, %v717, 0.0
        %v769 = vsel %vm697, %v720, 0.0
        %v770 = vsel %vm697, %v723, 0.0
        %v771 = vsel %vm697, %v726, 0.0
        %v772 = vsel %vm697, %v729, 0.0
        %v773 = vsel %vm697, %v732, 0.0
        %v774 = vsel %vm697, %v735, 0.0
        %v775 = vsel %vm697, %v738, 0.0
        %v776 = vsel %vm697, %v741, 0.0
        %v777 = vsel %vm697, %v744, 0.0
        %778 = vrot.lane.b32.xlu0 %v536, 8
        %v779 = vpop.permute.xlu0 %778
        %780 = vrot.lane.b32.xlu0 %v537, 8
        %v781 = vpop.permute.xlu0 %780
        %782 = vrot.lane.b32.xlu0 %v538, 8
        %v783 = vpop.permute.xlu0 %782
        %784 = vrot.lane.b32.xlu0 %v539, 8
        %v785 = vpop.permute.xlu0 %784
        %786 = vrot.lane.b32.xlu0 %v540, 8
        %v787 = vpop.permute.xlu0 %786
        %788 = vrot.lane.b32.xlu0 %v541, 8
        %v789 = vpop.permute.xlu0 %788
        %790 = vrot.lane.b32.xlu0 %v542, 8
        %v791 = vpop.permute.xlu0 %790
        %792 = vrot.lane.b32.xlu0 %v543, 8
        %v793 = vpop.permute.xlu0 %792
        %794 = vrot.lane.b32.xlu0 %v544, 8
        %v795 = vpop.permute.xlu0 %794
        %796 = vrot.lane.b32.xlu0 %v545, 8
        %v797 = vpop.permute.xlu0 %796
        %798 = vrot.lane.b32.xlu0 %v546, 8
        %v799 = vpop.permute.xlu0 %798
        %800 = vrot.lane.b32.xlu0 %v547, 8
        %v801 = vpop.permute.xlu0 %800
        %802 = vrot.lane.b32.xlu0 %v548, 8
        %v803 = vpop.permute.xlu0 %802
        %804 = vrot.lane.b32.xlu0 %v549, 8
        %v805 = vpop.permute.xlu0 %804
        %806 = vrot.lane.b32.xlu0 %v550, 8
        %v807 = vpop.permute.xlu0 %806
        %808 = vrot.lane.b32.xlu0 %v551, 8
        %v809 = vpop.permute.xlu0 %808
        %810 = vrot.lane.b32.xlu0 %v552, 8
        %v811 = vpop.permute.xlu0 %810
        %812 = vrot.lane.b32.xlu0 %v553, 8
        %v813 = vpop.permute.xlu0 %812
        %814 = vrot.lane.b32.xlu0 %v554, 8
        %v815 = vpop.permute.xlu0 %814
        %816 = vrot.lane.b32.xlu0 %v555, 8
        %v817 = vpop.permute.xlu0 %816
        %818 = vrot.lane.b32.xlu0 %v556, 8
        %v819 = vpop.permute.xlu0 %818
        %820 = vrot.lane.b32.xlu0 %v557, 8
        %v821 = vpop.permute.xlu0 %820
        %822 = vrot.lane.b32.xlu0 %v558, 8
        %v823 = vpop.permute.xlu0 %822
        %824 = vrot.lane.b32.xlu0 %v559, 8
        %v825 = vpop.permute.xlu0 %824
        %826 = vrot.lane.b32.xlu0 %v560, 8
        %v827 = vpop.permute.xlu0 %826
        %828 = vrot.lane.b32.xlu0 %v561, 8
        %v829 = vpop.permute.xlu0 %828
        %830 = vrot.lane.b32.xlu0 %v562, 8
        %v831 = vpop.permute.xlu0 %830
        %832 = vrot.lane.b32.xlu0 %v563, 8
        %v833 = vpop.permute.xlu0 %832
        %834 = vrot.lane.b32.xlu0 %v564, 8
        %v835 = vpop.permute.xlu0 %834
        %836 = vrot.lane.b32.xlu0 %v565, 8
        %v837 = vpop.permute.xlu0 %836
        %838 = vrot.lane.b32.xlu0 %v566, 8
        %v839 = vpop.permute.xlu0 %838
        %840 = vrot.lane.b32.xlu0 %v567, 8
        %v841 = vpop.permute.xlu0 %840
        %890 = vrot.lane.b32.xlu0 %v700, 16
        %v891 = vpop.permute.xlu0 %890
        %892 = vrot.lane.b32.xlu0 %v762, 16
        %v893 = vpop.permute.xlu0 %892
        %894 = vrot.lane.b32.xlu0 %v703, 16
        %v895 = vpop.permute.xlu0 %894
        %896 = vrot.lane.b32.xlu0 %v763, 16
        %v897 = vpop.permute.xlu0 %896
        %898 = vrot.lane.b32.xlu0 %v706, 16
        %v899 = vpop.permute.xlu0 %898
        %900 = vrot.lane.b32.xlu0 %v764, 16
        %v901 = vpop.permute.xlu0 %900
        %902 = vrot.lane.b32.xlu0 %v709, 16
        %v903 = vpop.permute.xlu0 %902
        %904 = vrot.lane.b32.xlu0 %v765, 16
        %v905 = vpop.permute.xlu0 %904
        %906 = vrot.lane.b32.xlu0 %v712, 16
        %v907 = vpop.permute.xlu0 %906
        %908 = vrot.lane.b32.xlu0 %v766, 16
        %v909 = vpop.permute.xlu0 %908
        %910 = vrot.lane.b32.xlu0 %v715, 16
        %v911 = vpop.permute.xlu0 %910
        %912 = vrot.lane.b32.xlu0 %v767, 16
        %v913 = vpop.permute.xlu0 %912
        %914 = vrot.lane.b32.xlu0 %v718, 16
        %v915 = vpop.permute.xlu0 %914
        %916 = vrot.lane.b32.xlu0 %v768, 16
        %v917 = vpop.permute.xlu0 %916
        %918 = vrot.lane.b32.xlu0 %v721, 16
        %v919 = vpop.permute.xlu0 %918
        %920 = vrot.lane.b32.xlu0 %v769, 16
        %v921 = vpop.permute.xlu0 %920
        %922 = vrot.lane.b32.xlu0 %v724, 16
        %v923 = vpop.permute.xlu0 %922
        %924 = vrot.lane.b32.xlu0 %v770, 16
        %v925 = vpop.permute.xlu0 %924
        %926 = vrot.lane.b32.xlu0 %v727, 16
        %v927 = vpop.permute.xlu0 %926
        %928 = vrot.lane.b32.xlu0 %v771, 16
        %v929 = vpop.permute.xlu0 %928
        %930 = vrot.lane.b32.xlu0 %v730, 16
        %v931 = vpop.permute.xlu0 %930
        %932 = vrot.lane.b32.xlu0 %v772, 16
        %v933 = vpop.permute.xlu0 %932
        %934 = vrot.lane.b32.xlu0 %v733, 16
        %v935 = vpop.permute.xlu0 %934
        %936 = vrot.lane.b32.xlu0 %v773, 16
        %v937 = vpop.permute.xlu0 %936
        %938 = vrot.lane.b32.xlu0 %v736, 16
        %v939 = vpop.permute.xlu0 %938
        %940 = vrot.lane.b32.xlu0 %v774, 16
        %v941 = vpop.permute.xlu0 %940
        %942 = vrot.lane.b32.xlu0 %v739, 16
        %v943 = vpop.permute.xlu0 %942
        %944 = vrot.lane.b32.xlu0 %v775, 16
        %v945 = vpop.permute.xlu0 %944
        %946 = vrot.lane.b32.xlu0 %v742, 16
        %v947 = vpop.permute.xlu0 %946
        %948 = vrot.lane.b32.xlu0 %v776, 16
        %v949 = vpop.permute.xlu0 %948
        %950 = vrot.lane.b32.xlu0 %v745, 16
        %v951 = vpop.permute.xlu0 %950
        %952 = vrot.lane.b32.xlu0 %v777, 16
        %v953 = vpop.permute.xlu0 %952
        %vm986 = vcmask 64512
        %v987 = vsel %vm986, %v681, %v779
        %v988 = vsel %vm986, %v603, %v781
        %v989 = vsel %vm986, %v682, %v783
        %v990 = vsel %vm986, %v606, %v785
        %v991 = vsel %vm986, %v683, %v787
        %v992 = vsel %vm986, %v609, %v789
        %v993 = vsel %vm986, %v684, %v791
        %v994 = vsel %vm986, %v612, %v793
        %v995 = vsel %vm986, %v685, %v795
        %v996 = vsel %vm986, %v615, %v797
        %v997 = vsel %vm986, %v686, %v799
        %v998 = vsel %vm986, %v618, %v801
        %v999 = vsel %vm986, %v687, %v803
        %v1000 = vsel %vm986, %v621, %v805
        %v1001 = vsel %vm986, %v688, %v807
        %v1002 = vsel %vm986, %v624, %v809
        %v1003 = vsel %vm986, %v689, %v811
        %v1004 = vsel %vm986, %v627, %v813
        %v1005 = vsel %vm986, %v690, %v815
        %v1006 = vsel %vm986, %v630, %v817
        %v1007 = vsel %vm986, %v691, %v819
        %v1008 = vsel %vm986, %v633, %v821
        %v1009 = vsel %vm986, %v692, %v823
        %v1010 = vsel %vm986, %v636, %v825
        %v1011 = vsel %vm986, %v693, %v827
        %v1012 = vsel %vm986, %v639, %v829
        %v1013 = vsel %vm986, %v694, %v831
        %v1014 = vsel %vm986, %v642, %v833
        %v1015 = vsel %vm986, %v695, %v835
        %v1016 = vsel %vm986, %v645, %v837
        %v1017 = vsel %vm986, %v696, %v839
        %v1018 = vsel %vm986, %v648, %v841
        %vm1019 = vcmask 130048
        %v1020 = vsel %vm1019, %v987, %v891
        %v1021 = vsel %vm1019, %v988, %v893
        %v1022 = vsel %vm1019, %v989, %v895
        %v1023 = vsel %vm1019, %v990, %v897
        %v1024 = vsel %vm1019, %v991, %v899
        %v1025 = vsel %vm1019, %v992, %v901
        %v1026 = vsel %vm1019, %v993, %v903
        %v1027 = vsel %vm1019, %v994, %v905
        %v1028 = vsel %vm1019, %v995, %v907
        %v1029 = vsel %vm1019, %v996, %v909
        %v1030 = vsel %vm1019, %v997, %v911
        %v1031 = vsel %vm1019, %v998, %v913
        %v1032 = vsel %vm1019, %v999, %v915
        %v1033 = vsel %vm1019, %v1000, %v917
        %v1034 = vsel %vm1019, %v1001, %v919
        %v1035 = vsel %vm1019, %v1002, %v921
        %v1036 = vsel %vm1019, %v1003, %v923
        %v1037 = vsel %vm1019, %v1004, %v925
        %v1038 = vsel %vm1019, %v1005, %v927
        %v1039 = vsel %vm1019, %v1006, %v929
        %v1040 = vsel %vm1019, %v1007, %v931
        %v1041 = vsel %vm1019, %v1008, %v933
        %v1042 = vsel %vm1019, %v1009, %v935
        %v1043 = vsel %vm1019, %v1010, %v937
        %v1044 = vsel %vm1019, %v1011, %v939
        %v1045 = vsel %vm1019, %v1012, %v941
        %v1046 = vsel %vm1019, %v1013, %v943
        %v1047 = vsel %vm1019, %v1014, %v945
        %v1048 = vsel %vm1019, %v1015, %v947
        %v1049 = vsel %vm1019, %v1016, %v949
        %v1050 = vsel %vm1019, %v1017, %v951
        %v1051 = vsel %vm1019, %v1018, %v953
        %1084 = vrot.lane.b32.xlu0 %v1020, 24
        %v1085 = vpop.permute.xlu0 %1084
        %1086 = vrot.lane.b32.xlu0 %v1021, 24
        %v1087 = vpop.permute.xlu0 %1086
        %1088 = vrot.lane.b32.xlu0 %v1022, 24
        %v1089 = vpop.permute.xlu0 %1088
        %1090 = vrot.lane.b32.xlu0 %v1023, 24
        %v1091 = vpop.permute.xlu0 %1090
        %1092 = vrot.lane.b32.xlu0 %v1024, 24
        %v1093 = vpop.permute.xlu0 %1092
        %1094 = vrot.lane.b32.xlu0 %v1025, 24
        %v1095 = vpop.permute.xlu0 %1094
        %1096 = vrot.lane.b32.xlu0 %v1026, 24
        %v1097 = vpop.permute.xlu0 %1096
        %1098 = vrot.lane.b32.xlu0 %v1027, 24
        %v1099 = vpop.permute.xlu0 %1098
        %1100 = vrot.lane.b32.xlu0 %v1028, 24
        %v1101 = vpop.permute.xlu0 %1100
        %1102 = vrot.lane.b32.xlu0 %v1029, 24
        %v1103 = vpop.permute.xlu0 %1102
        %1104 = vrot.lane.b32.xlu0 %v1030, 24
        %v1105 = vpop.permute.xlu0 %1104
        %1106 = vrot.lane.b32.xlu0 %v1031, 24
        %v1107 = vpop.permute.xlu0 %1106
        %1108 = vrot.lane.b32.xlu0 %v1032, 24
        %v1109 = vpop.permute.xlu0 %1108
        %1110 = vrot.lane.b32.xlu0 %v1033, 24
        %v1111 = vpop.permute.xlu0 %1110
        %1112 = vrot.lane.b32.xlu0 %v1034, 24
        %v1113 = vpop.permute.xlu0 %1112
        %1114 = vrot.lane.b32.xlu0 %v1035, 24
        %v1115 = vpop.permute.xlu0 %1114
        %1116 = vrot.lane.b32.xlu0 %v1036, 24
        %v1117 = vpop.permute.xlu0 %1116
        %1118 = vrot.lane.b32.xlu0 %v1037, 24
        %v1119 = vpop.permute.xlu0 %1118
        %1120 = vrot.lane.b32.xlu0 %v1038, 24
        %v1121 = vpop.permute.xlu0 %1120
        %1122 = vrot.lane.b32.xlu0 %v1039, 24
        %v1123 = vpop.permute.xlu0 %1122
        %1124 = vrot.lane.b32.xlu0 %v1040, 24
        %v1125 = vpop.permute.xlu0 %1124
        %1126 = vrot.lane.b32.xlu0 %v1041, 24
        %v1127 = vpop.permute.xlu0 %1126
        %1128 = vrot.lane.b32.xlu0 %v1042, 24
        %v1129 = vpop.permute.xlu0 %1128
        %1130 = vrot.lane.b32.xlu0 %v1043, 24
        %v1131 = vpop.permute.xlu0 %1130
        %1132 = vrot.lane.b32.xlu0 %v1044, 24
        %v1133 = vpop.permute.xlu0 %1132
        %1134 = vrot.lane.b32.xlu0 %v1045, 24
        %v1135 = vpop.permute.xlu0 %1134
        %1136 = vrot.lane.b32.xlu0 %v1046, 24
        %v1137 = vpop.permute.xlu0 %1136
        %1138 = vrot.lane.b32.xlu0 %v1047, 24
        %v1139 = vpop.permute.xlu0 %1138
        %1140 = vrot.lane.b32.xlu0 %v1048, 24
        %v1141 = vpop.permute.xlu0 %1140
        %1142 = vrot.lane.b32.xlu0 %v1049, 24
        %v1143 = vpop.permute.xlu0 %1142
        %1144 = vrot.lane.b32.xlu0 %v1050, 24
        %v1145 = vpop.permute.xlu0 %1144
        %1146 = vrot.lane.b32.xlu0 %v1051, 24
        %v1147 = vpop.permute.xlu0 %1146
        %1181 = vrot.lane.b32.xlu0 %v1022, 48
        %v1182 = vpop.permute.xlu0 %1181
        %1183 = vrot.lane.b32.xlu0 %v1023, 48
        %v1184 = vpop.permute.xlu0 %1183
        %1185 = vrot.lane.b32.xlu0 %v1024, 48
        %v1186 = vpop.permute.xlu0 %1185
        %1187 = vrot.lane.b32.xlu0 %v1025, 48
        %v1188 = vpop.permute.xlu0 %1187
        %1189 = vrot.lane.b32.xlu0 %v1026, 48
        %v1190 = vpop.permute.xlu0 %1189
        %1191 = vrot.lane.b32.xlu0 %v1027, 48
        %v1192 = vpop.permute.xlu0 %1191
        %1193 = vrot.lane.b32.xlu0 %v1028, 48
        %v1194 = vpop.permute.xlu0 %1193
        %1195 = vrot.lane.b32.xlu0 %v1029, 48
        %v1196 = vpop.permute.xlu0 %1195
        %1197 = vrot.lane.b32.xlu0 %v1030, 48
        %v1198 = vpop.permute.xlu0 %1197
        %1199 = vrot.lane.b32.xlu0 %v1031, 48
        %v1200 = vpop.permute.xlu0 %1199
        %1201 = vrot.lane.b32.xlu0 %v1032, 48
        %v1202 = vpop.permute.xlu0 %1201
        %1203 = vrot.lane.b32.xlu0 %v1033, 48
        %v1204 = vpop.permute.xlu0 %1203
        %1205 = vrot.lane.b32.xlu0 %v1034, 48
        %v1206 = vpop.permute.xlu0 %1205
        %1207 = vrot.lane.b32.xlu0 %v1035, 48
        %v1208 = vpop.permute.xlu0 %1207
        %1209 = vrot.lane.b32.xlu0 %v1036, 48
        %v1210 = vpop.permute.xlu0 %1209
        %1211 = vrot.lane.b32.xlu0 %v1037, 48
        %v1212 = vpop.permute.xlu0 %1211
        %1213 = vrot.lane.b32.xlu0 %v1038, 48
        %v1214 = vpop.permute.xlu0 %1213
        %1215 = vrot.lane.b32.xlu0 %v1039, 48
        %v1216 = vpop.permute.xlu0 %1215
        %1217 = vrot.lane.b32.xlu0 %v1040, 48
        %v1218 = vpop.permute.xlu0 %1217
        %1219 = vrot.lane.b32.xlu0 %v1041, 48
        %v1220 = vpop.permute.xlu0 %1219
        %1221 = vrot.lane.b32.xlu0 %v1042, 48
        %v1222 = vpop.permute.xlu0 %1221
        %1223 = vrot.lane.b32.xlu0 %v1043, 48
        %v1224 = vpop.permute.xlu0 %1223
        %1225 = vrot.lane.b32.xlu0 %v1044, 48
        %v1226 = vpop.permute.xlu0 %1225
        %1227 = vrot.lane.b32.xlu0 %v1045, 48
        %v1228 = vpop.permute.xlu0 %1227
        %1229 = vrot.lane.b32.xlu0 %v1046, 48
        %v1230 = vpop.permute.xlu0 %1229
        %1231 = vrot.lane.b32.xlu0 %v1047, 48
        %v1232 = vpop.permute.xlu0 %1231
        %1233 = vrot.lane.b32.xlu0 %v1048, 48
        %v1234 = vpop.permute.xlu0 %1233
        %1235 = vrot.lane.b32.xlu0 %v1049, 48
        %v1236 = vpop.permute.xlu0 %1235
        %1237 = vrot.lane.b32.xlu0 %v1050, 48
        %v1238 = vpop.permute.xlu0 %1237
        %1239 = vrot.lane.b32.xlu0 %v1051, 48
        %v1240 = vpop.permute.xlu0 %1239
        %1241 = vrot.lane.b32.xlu0 0.0, 48
        %v1242 = vpop.permute.xlu0 %1241
        %vm1274 = vcmask 195584
        %v1275 = vsel %vm1274, 0.0, %v1085
        %v1276 = vsel %vm1274, 0.0, %v1087
        %v1277 = vsel %vm1274, %v1020, %v1089
        %v1278 = vsel %vm1274, %v1021, %v1091
        %v1279 = vsel %vm1274, %v1022, %v1093
        %v1280 = vsel %vm1274, %v1023, %v1095
        %v1281 = vsel %vm1274, %v1024, %v1097
        %v1282 = vsel %vm1274, %v1025, %v1099
        %v1283 = vsel %vm1274, %v1026, %v1101
        %v1284 = vsel %vm1274, %v1027, %v1103
        %v1285 = vsel %vm1274, %v1028, %v1105
        %v1286 = vsel %vm1274, %v1029, %v1107
        %v1287 = vsel %vm1274, %v1030, %v1109
        %v1288 = vsel %vm1274, %v1031, %v1111
        %v1289 = vsel %vm1274, %v1032, %v1113
        %v1290 = vsel %vm1274, %v1033, %v1115
        %v1291 = vsel %vm1274, %v1034, %v1117
        %v1292 = vsel %vm1274, %v1035, %v1119
        %v1293 = vsel %vm1274, %v1036, %v1121
        %v1294 = vsel %vm1274, %v1037, %v1123
        %v1295 = vsel %vm1274, %v1038, %v1125
        %v1296 = vsel %vm1274, %v1039, %v1127
        %v1297 = vsel %vm1274, %v1040, %v1129
        %v1298 = vsel %vm1274, %v1041, %v1131
        %v1299 = vsel %vm1274, %v1042, %v1133
        %v1300 = vsel %vm1274, %v1043, %v1135
        %v1301 = vsel %vm1274, %v1044, %v1137
        %v1302 = vsel %vm1274, %v1045, %v1139
        %v1303 = vsel %vm1274, %v1046, %v1141
        %v1304 = vsel %vm1274, %v1047, %v1143
        %v1305 = vsel %vm1274, %v1048, %v1145
        %v1306 = vsel %vm1274, %v1049, %v1147
        %vm1307 = vcmask 392192
        %v1308 = vsel %vm1307, %v1275, %v1182
        %v1309 = vsel %vm1307, %v1276, %v1184
        %v1310 = vsel %vm1307, %v1277, %v1186
        %v1311 = vsel %vm1307, %v1278, %v1188
        %v1312 = vsel %vm1307, %v1279, %v1190
        %v1313 = vsel %vm1307, %v1280, %v1192
        %v1314 = vsel %vm1307, %v1281, %v1194
        %v1315 = vsel %vm1307, %v1282, %v1196
        %v1316 = vsel %vm1307, %v1283, %v1198
        %v1317 = vsel %vm1307, %v1284, %v1200
        %v1318 = vsel %vm1307, %v1285, %v1202
        %v1319 = vsel %vm1307, %v1286, %v1204
        %v1320 = vsel %vm1307, %v1287, %v1206
        %v1321 = vsel %vm1307, %v1288, %v1208
        %v1322 = vsel %vm1307, %v1289, %v1210
        %v1323 = vsel %vm1307, %v1290, %v1212
        %v1324 = vsel %vm1307, %v1291, %v1214
        %v1325 = vsel %vm1307, %v1292, %v1216
        %v1326 = vsel %vm1307, %v1293, %v1218
        %v1327 = vsel %vm1307, %v1294, %v1220
        %v1328 = vsel %vm1307, %v1295, %v1222
        %v1329 = vsel %vm1307, %v1296, %v1224
        %v1330 = vsel %vm1307, %v1297, %v1226
        %v1331 = vsel %vm1307, %v1298, %v1228
        %v1332 = vsel %vm1307, %v1299, %v1230
        %v1333 = vsel %vm1307, %v1300, %v1232
        %v1334 = vsel %vm1307, %v1301, %v1234
        %v1335 = vsel %vm1307, %v1302, %v1236
        %v1336 = vsel %vm1307, %v1303, %v1238
        %v1337 = vsel %vm1307, %v1304, %v1240
        %v1338 = vsel %vm1307, %v1305, %v1242
        %v1339 = vsel %vm1307, %v1306, %v1242
        %v1340 = vld [vmem:[%s4] sm:$0xff]
        %v1341 = vld [vmem:[%s4 + $0x8] sm:$0xff]
        %v1342 = vld [vmem:[%s4 + $0x10] sm:$0xff]
        %v1343 = vld [vmem:[%s4 + $0x18] sm:$0xff]
        %v1344 = vld [vmem:[%s4 + $0x20] sm:$0xff]
        %v1345 = vld [vmem:[%s4 + $0x28] sm:$0xff]
        %v1346 = vld [vmem:[%s4 + $0x30] sm:$0xff]
        %v1347 = vld [vmem:[%s4 + $0x38] sm:$0xff]
        %v1348 = vld [vmem:[%s4 + $0x40] sm:$0xff]
        %vm1349 = vcmask 588800
        %v1351 = vsel %vm1349, %v1308, 0
        %v1354 = vsel %vm1349, %v1309, 0
        %v1357 = vsel %vm1349, %v1310, 0
        %v1360 = vsel %vm1349, %v1311, 0
        %v1363 = vsel %vm1349, %v1312, 0
        %v1366 = vsel %vm1349, %v1313, 0
        %v1369 = vsel %vm1349, %v1314, 0
        %v1372 = vsel %vm1349, %v1315, 0
        %v1375 = vsel %vm1349, %v1316, 0
        %v1378 = vsel %vm1349, %v1317, 0
        %v1381 = vsel %vm1349, %v1318, 0
        %v1384 = vsel %vm1349, %v1319, 0
        %v1387 = vsel %vm1349, %v1320, 0
        %v1390 = vsel %vm1349, %v1321, 0
        %v1393 = vsel %vm1349, %v1322, 0
        %v1396 = vsel %vm1349, %v1323, 0
        %v1399 = vsel %vm1349, %v1324, 0
        %v1402 = vsel %vm1349, %v1325, 0
        %v1405 = vsel %vm1349, %v1326, 0
        %v1408 = vsel %vm1349, %v1327, 0
        %v1411 = vsel %vm1349, %v1328, 0
        %v1414 = vsel %vm1349, %v1329, 0
        %v1417 = vsel %vm1349, %v1330, 0
        %v1420 = vsel %vm1349, %v1331, 0
        %v1423 = vsel %vm1349, %v1332, 0
        %v1426 = vsel %vm1349, %v1333, 0
        %v1429 = vsel %vm1349, %v1334, 0
        %v1432 = vsel %vm1349, %v1335, 0
        %v1435 = vsel %vm1349, %v1336, 0
        %v1438 = vsel %vm1349, %v1337, 0
        %v1441 = vsel %vm1349, %v1338, 0
        %v1444 = vsel %vm1349, %v1339, 0
        %1446 = vmatpush.msra.mxu0 0.0
        %1447 = vmatpush.msra.mxu0 0.0
        %1448 = vmatpush.msra.mxu0 0.0
        %1449 = vmatpush.msra.mxu0 0.0
        %1450 = vmatpush.msra.mxu0 0.0
        %1451 = vmatpush.msra.mxu0 0.0
        %1452 = vmatpush.msra.mxu0 0.0
        %1453 = vmatpush.msra.mxu0 %v1348
        %1454 = vmatpush.msra.mxu0 %v1347
        %1455 = vmatpush.msra.mxu0 %v1346
        %1456 = vmatpush.msra.mxu0 %v1345
        %1457 = vmatpush.msra.mxu0 %v1344
        %1458 = vmatpush.msra.mxu0 %v1343
        %1459 = vmatpush.msra.mxu0 %v1342
        %1460 = vmatpush.msra.mxu0 %v1341
        %1461 = vmatpush.msra.mxu0 %v1340
        %1462 = vmatmul.f32.gmra.mxu0 %v1351
        %v1463 = vpop.f32.mrf.mxu0
        %v1464 = vadd.f32 0.0, %v1463
        %1465 = vmatmul.f32.gmra.mxu0 %v1354
        %v1466 = vpop.f32.mrf.mxu0
        %v1467 = vadd.f32 0.0, %v1466
        %1468 = vmatmul.f32.gmra.mxu0 %v1357
        %v1469 = vpop.f32.mrf.mxu0
        %v1470 = vadd.f32 0.0, %v1469
        %1471 = vmatmul.f32.gmra.mxu0 %v1360
        %v1472 = vpop.f32.mrf.mxu0
        %v1473 = vadd.f32 0.0, %v1472
        %1474 = vmatmul.f32.gmra.mxu0 %v1363
        %v1475 = vpop.f32.mrf.mxu0
        %v1476 = vadd.f32 0.0, %v1475
        %1477 = vmatmul.f32.gmra.mxu0 %v1366
        %v1478 = vpop.f32.mrf.mxu0
        %v1479 = vadd.f32 0.0, %v1478
        %1480 = vmatmul.f32.gmra.mxu0 %v1369
        %v1481 = vpop.f32.mrf.mxu0
        %v1482 = vadd.f32 0.0, %v1481
        %1483 = vmatmul.f32.gmra.mxu0 %v1372
        %v1484 = vpop.f32.mrf.mxu0
        %v1485 = vadd.f32 0.0, %v1484
        %1486 = vmatmul.f32.gmra.mxu0 %v1375
        %v1487 = vpop.f32.mrf.mxu0
        %v1488 = vadd.f32 0.0, %v1487
        %1489 = vmatmul.f32.gmra.mxu0 %v1378
        %v1490 = vpop.f32.mrf.mxu0
        %v1491 = vadd.f32 0.0, %v1490
        %1492 = vmatmul.f32.gmra.mxu0 %v1381
        %v1493 = vpop.f32.mrf.mxu0
        %v1494 = vadd.f32 0.0, %v1493
        %1495 = vmatmul.f32.gmra.mxu0 %v1384
        %v1496 = vpop.f32.mrf.mxu0
        %v1497 = vadd.f32 0.0, %v1496
        %1498 = vmatmul.f32.gmra.mxu0 %v1387
        %v1499 = vpop.f32.mrf.mxu0
        %v1500 = vadd.f32 0.0, %v1499
        %1501 = vmatmul.f32.gmra.mxu0 %v1390
        %v1502 = vpop.f32.mrf.mxu0
        %v1503 = vadd.f32 0.0, %v1502
        %1504 = vmatmul.f32.gmra.mxu0 %v1393
        %v1505 = vpop.f32.mrf.mxu0
        %v1506 = vadd.f32 0.0, %v1505
        %1507 = vmatmul.f32.gmra.mxu0 %v1396
        %v1508 = vpop.f32.mrf.mxu0
        %v1509 = vadd.f32 0.0, %v1508
        %1510 = vmatmul.f32.gmra.mxu0 %v1399
        %v1511 = vpop.f32.mrf.mxu0
        %v1512 = vadd.f32 0.0, %v1511
        %1513 = vmatmul.f32.gmra.mxu0 %v1402
        %v1514 = vpop.f32.mrf.mxu0
        %v1515 = vadd.f32 0.0, %v1514
        %1516 = vmatmul.f32.gmra.mxu0 %v1405
        %v1517 = vpop.f32.mrf.mxu0
        %v1518 = vadd.f32 0.0, %v1517
        %1519 = vmatmul.f32.gmra.mxu0 %v1408
        %v1520 = vpop.f32.mrf.mxu0
        %v1521 = vadd.f32 0.0, %v1520
        %1522 = vmatmul.f32.gmra.mxu0 %v1411
        %v1523 = vpop.f32.mrf.mxu0
        %v1524 = vadd.f32 0.0, %v1523
        %1525 = vmatmul.f32.gmra.mxu0 %v1414
        %v1526 = vpop.f32.mrf.mxu0
        %v1527 = vadd.f32 0.0, %v1526
        %1528 = vmatmul.f32.gmra.mxu0 %v1417
        %v1529 = vpop.f32.mrf.mxu0
        %v1530 = vadd.f32 0.0, %v1529
        %1531 = vmatmul.f32.gmra.mxu0 %v1420
        %v1532 = vpop.f32.mrf.mxu0
        %v1533 = vadd.f32 0.0, %v1532
        %1534 = vmatmul.f32.gmra.mxu0 %v1423
        %v1535 = vpop.f32.mrf.mxu0
        %v1536 = vadd.f32 0.0, %v1535
        %1537 = vmatmul.f32.gmra.mxu0 %v1426
        %v1538 = vpop.f32.mrf.mxu0
        %v1539 = vadd.f32 0.0, %v1538
        %1540 = vmatmul.f32.gmra.mxu0 %v1429
        %v1541 = vpop.f32.mrf.mxu0
        %v1542 = vadd.f32 0.0, %v1541
        %1543 = vmatmul.f32.gmra.mxu0 %v1432
        %v1544 = vpop.f32.mrf.mxu0
        %v1545 = vadd.f32 0.0, %v1544
        %1546 = vmatmul.f32.gmra.mxu0 %v1435
        %v1547 = vpop.f32.mrf.mxu0
        %v1548 = vadd.f32 0.0, %v1547
        %1549 = vmatmul.f32.gmra.mxu0 %v1438
        %v1550 = vpop.f32.mrf.mxu0
        %v1551 = vadd.f32 0.0, %v1550
        %1552 = vmatmul.f32.gmra.mxu0 %v1441
        %v1553 = vpop.f32.mrf.mxu0
        %v1554 = vadd.f32 0.0, %v1553
        %1555 = vmatmul.f32.gmra.mxu0 %v1444
        %v1556 = vpop.f32.mrf.mxu0
        %v1557 = vadd.f32 0.0, %v1556
        %1558 = vdwg.mxu0
        %v1559 = vsel %vm1019, %v1464, -inf
        %v1560 = vsel %vm1019, %v1470, -inf
        %v1561 = vmax.f32 %v1559, %v1560
        %v1562 = vsel %vm1019, %v1467, -inf
        %v1563 = vsel %vm1019, %v1473, -inf
        %v1564 = vmax.f32 %v1562, %v1563
        %v1565 = vsel %vm1019, %v1476, -inf
        %v1566 = vsel %vm1019, %v1482, -inf
        %v1567 = vmax.f32 %v1565, %v1566
        %v1568 = vsel %vm1019, %v1479, -inf
        %v1569 = vsel %vm1019, %v1485, -inf
        %v1570 = vmax.f32 %v1568, %v1569
        %v1571 = vsel %vm1019, %v1488, -inf
        %v1572 = vsel %vm1019, %v1494, -inf
        %v1573 = vmax.f32 %v1571, %v1572
        %v1574 = vsel %vm1019, %v1491, -inf
        %v1575 = vsel %vm1019, %v1497, -inf
        %v1576 = vmax.f32 %v1574, %v1575
        %v1577 = vsel %vm1019, %v1500, -inf
        %v1578 = vsel %vm1019, %v1506, -inf
        %v1579 = vmax.f32 %v1577, %v1578
        %v1580 = vsel %vm1019, %v1503, -inf
        %v1581 = vsel %vm1019, %v1509, -inf
        %v1582 = vmax.f32 %v1580, %v1581
        %v1583 = vsel %vm1019, %v1512, -inf
        %v1584 = vsel %vm1019, %v1518, -inf
        %v1585 = vmax.f32 %v1583, %v1584
        %v1586 = vsel %vm1019, %v1515, -inf
        %v1587 = vsel %vm1019, %v1521, -inf
        %v1588 = vmax.f32 %v1586, %v1587
        %v1589 = vsel %vm1019, %v1524, -inf
        %v1590 = vsel %vm1019, %v1530, -inf
        %v1591 = vmax.f32 %v1589, %v1590
        %v1592 = vsel %vm1019, %v1527, -inf
        %v1593 = vsel %vm1019, %v1533, -inf
        %v1594 = vmax.f32 %v1592, %v1593
        %v1595 = vsel %vm1019, %v1536, -inf
        %v1596 = vsel %vm1019, %v1542, -inf
        %v1597 = vmax.f32 %v1595, %v1596
        %v1598 = vsel %vm1019, %v1539, -inf
        %v1599 = vsel %vm1019, %v1545, -inf
        %v1600 = vmax.f32 %v1598, %v1599
        %v1601 = vsel %vm1019, %v1548, -inf
        %v1602 = vsel %vm1019, %v1554, -inf
        %v1603 = vmax.f32 %v1601, %v1602
        %v1604 = vsel %vm1019, %v1551, -inf
        %v1605 = vsel %vm1019, %v1557, -inf
        %v1606 = vmax.f32 %v1604, %v1605
        %v1607 = vrot.slane %v1573, 4
        %vm1608 = vcmask 1047556
        %v1609 = vsel %vm1608, %v1607, %v1561
        %v1610 = vrot.slane %v1561, 4
        %v1611 = vsel %vm1608, %v1573, %v1610
        %v1613 = vunpack.c.l.s4 1983009808
        %v1614 = vunpack.c.0.s8 %v1613
        %v1615 = vperm.slane %v1609, %v1614
        %v1617 = vunpack.c.l.s4 1983009808
        %v1618 = vunpack.c.0.s8 %v1617
        %v1619 = vperm.slane %v1611, %v1618
        %v1620 = vrot.slane %v1579, 4
        %v1621 = vsel %vm1608, %v1620, %v1567
        %v1622 = vrot.slane %v1567, 4
        %v1623 = vsel %vm1608, %v1579, %v1622
        %v1625 = vunpack.c.l.s4 1983009808
        %v1626 = vunpack.c.0.s8 %v1625
        %v1627 = vperm.slane %v1621, %v1626
        %v1629 = vunpack.c.l.s4 1983009808
        %v1630 = vunpack.c.0.s8 %v1629
        %v1631 = vperm.slane %v1623, %v1630
        %v1632 = vrot.slane %v1597, 4
        %v1633 = vsel %vm1608, %v1632, %v1585
        %v1634 = vrot.slane %v1585, 4
        %v1635 = vsel %vm1608, %v1597, %v1634
        %v1637 = vunpack.c.l.s4 1983009808
        %v1638 = vunpack.c.0.s8 %v1637
        %v1639 = vperm.slane %v1633, %v1638
        %v1641 = vunpack.c.l.s4 1983009808
        %v1642 = vunpack.c.0.s8 %v1641
        %v1643 = vperm.slane %v1635, %v1642
        %v1644 = vrot.slane %v1603, 4
        %v1645 = vsel %vm1608, %v1644, %v1591
        %v1646 = vrot.slane %v1591, 4
        %v1647 = vsel %vm1608, %v1603, %v1646
        %v1649 = vunpack.c.l.s4 1983009808
        %v1650 = vunpack.c.0.s8 %v1649
        %v1651 = vperm.slane %v1645, %v1650
        %v1653 = vunpack.c.l.s4 1983009808
        %v1654 = vunpack.c.0.s8 %v1653
        %v1655 = vperm.slane %v1647, %v1654
        %v1656 = vrot.slane %v1627, 4
        %v1657 = vsel %vm1608, %v1656, %v1615
        %v1658 = vrot.slane %v1615, 4
        %v1659 = vsel %vm1608, %v1627, %v1658
        %v1661 = vunpack.c.l.s4 1934713408
        %v1662 = vunpack.c.0.s8 %v1661
        %v1663 = vperm.slane %v1657, %v1662
        %v1665 = vunpack.c.l.s4 1934713408
        %v1666 = vunpack.c.0.s8 %v1665
        %v1667 = vperm.slane %v1659, %v1666
        %v1668 = vrot.slane %v1631, 4
        %v1669 = vsel %vm1608, %v1668, %v1619
        %v1670 = vrot.slane %v1619, 4
        %v1671 = vsel %vm1608, %v1631, %v1670
        %v1673 = vunpack.c.l.s4 1934713408
        %v1674 = vunpack.c.0.s8 %v1673
        %v1675 = vperm.slane %v1669, %v1674
        %v1677 = vunpack.c.l.s4 1934713408
        %v1678 = vunpack.c.0.s8 %v1677
        %v1679 = vperm.slane %v1671, %v1678
        %v1680 = vrot.slane %v1651, 4
        %v1681 = vsel %vm1608, %v1680, %v1639
        %v1682 = vrot.slane %v1639, 4
        %v1683 = vsel %vm1608, %v1651, %v1682
        %v1685 = vunpack.c.l.s4 1934713408
        %v1686 = vunpack.c.0.s8 %v1685
        %v1687 = vperm.slane %v1681, %v1686
        %v1689 = vunpack.c.l.s4 1934713408
        %v1690 = vunpack.c.0.s8 %v1689
        %v1691 = vperm.slane %v1683, %v1690
        %v1692 = vrot.slane %v1655, 4
        %v1693 = vsel %vm1608, %v1692, %v1643
        %v1694 = vrot.slane %v1643, 4
        %v1695 = vsel %vm1608, %v1655, %v1694
        %v1697 = vunpack.c.l.s4 1934713408
        %v1698 = vunpack.c.0.s8 %v1697
        %v1699 = vperm.slane %v1693, %v1698
        %v1701 = vunpack.c.l.s4 1934713408
        %v1702 = vunpack.c.0.s8 %v1701
        %v1703 = vperm.slane %v1695, %v1702
        %v1704 = vrot.slane %v1687, 4
        %v1705 = vsel %vm1608, %v1704, %v1663
        %v1706 = vrot.slane %v1663, 4
        %v1707 = vsel %vm1608, %v1687, %v1706
        %v1708 = vrot.slane %v1691, 4
        %v1709 = vsel %vm1608, %v1708, %v1667
        %v1710 = vrot.slane %v1667, 4
        %v1711 = vsel %vm1608, %v1691, %v1710
        %v1712 = vrot.slane %v1699, 4
        %v1713 = vsel %vm1608, %v1712, %v1675
        %v1714 = vrot.slane %v1675, 4
        %v1715 = vsel %vm1608, %v1699, %v1714
        %v1716 = vrot.slane %v1703, 4
        %v1717 = vsel %vm1608, %v1716, %v1679
        %v1718 = vrot.slane %v1679, 4
        %v1719 = vsel %vm1608, %v1703, %v1718
        %v1720 = vrot.slane %v1576, 4
        %v1721 = vsel %vm1608, %v1720, %v1564
        %v1722 = vrot.slane %v1564, 4
        %v1723 = vsel %vm1608, %v1576, %v1722
        %v1725 = vunpack.c.l.s4 1983009808
        %v1726 = vunpack.c.0.s8 %v1725
        %v1727 = vperm.slane %v1721, %v1726
        %v1729 = vunpack.c.l.s4 1983009808
        %v1730 = vunpack.c.0.s8 %v1729
        %v1731 = vperm.slane %v1723, %v1730
        %v1732 = vrot.slane %v1582, 4
        %v1733 = vsel %vm1608, %v1732, %v1570
        %v1734 = vrot.slane %v1570, 4
        %v1735 = vsel %vm1608, %v1582, %v1734
        %v1737 = vunpack.c.l.s4 1983009808
        %v1738 = vunpack.c.0.s8 %v1737
        %v1739 = vperm.slane %v1733, %v1738
        %v1741 = vunpack.c.l.s4 1983009808
        %v1742 = vunpack.c.0.s8 %v1741
        %v1743 = vperm.slane %v1735, %v1742
        %v1744 = vrot.slane %v1600, 4
        %v1745 = vsel %vm1608, %v1744, %v1588
        %v1746 = vrot.slane %v1588, 4
        %v1747 = vsel %vm1608, %v1600, %v1746
        %v1749 = vunpack.c.l.s4 1983009808
        %v1750 = vunpack.c.0.s8 %v1749
        %v1751 = vperm.slane %v1745, %v1750
        %v1753 = vunpack.c.l.s4 1983009808
        %v1754 = vunpack.c.0.s8 %v1753
        %v1755 = vperm.slane %v1747, %v1754
        %v1756 = vrot.slane %v1606, 4
        %v1757 = vsel %vm1608, %v1756, %v1594
        %v1758 = vrot.slane %v1594, 4
        %v1759 = vsel %vm1608, %v1606, %v1758
        %v1761 = vunpack.c.l.s4 1983009808
        %v1762 = vunpack.c.0.s8 %v1761
        %v1763 = vperm.slane %v1757, %v1762
        %v1765 = vunpack.c.l.s4 1983009808
        %v1766 = vunpack.c.0.s8 %v1765
        %v1767 = vperm.slane %v1759, %v1766
        %v1768 = vrot.slane %v1739, 4
        %v1769 = vsel %vm1608, %v1768, %v1727
        %v1770 = vrot.slane %v1727, 4
        %v1771 = vsel %vm1608, %v1739, %v1770
        %v1773 = vunpack.c.l.s4 1934713408
        %v1774 = vunpack.c.0.s8 %v1773
        %v1775 = vperm.slane %v1769, %v1774
        %v1777 = vunpack.c.l.s4 1934713408
        %v1778 = vunpack.c.0.s8 %v1777
        %v1779 = vperm.slane %v1771, %v1778
        %v1780 = vrot.slane %v1743, 4
        %v1781 = vsel %vm1608, %v1780, %v1731
        %v1782 = vrot.slane %v1731, 4
        %v1783 = vsel %vm1608, %v1743, %v1782
        %v1785 = vunpack.c.l.s4 1934713408
        %v1786 = vunpack.c.0.s8 %v1785
        %v1787 = vperm.slane %v1781, %v1786
        %v1789 = vunpack.c.l.s4 1934713408
        %v1790 = vunpack.c.0.s8 %v1789
        %v1791 = vperm.slane %v1783, %v1790
        %v1792 = vrot.slane %v1763, 4
        %v1793 = vsel %vm1608, %v1792, %v1751
        %v1794 = vrot.slane %v1751, 4
        %v1795 = vsel %vm1608, %v1763, %v1794
        %v1797 = vunpack.c.l.s4 1934713408
        %v1798 = vunpack.c.0.s8 %v1797
        %v1799 = vperm.slane %v1793, %v1798
        %v1801 = vunpack.c.l.s4 1934713408
        %v1802 = vunpack.c.0.s8 %v1801
        %v1803 = vperm.slane %v1795, %v1802
        %v1804 = vrot.slane %v1767, 4
        %v1805 = vsel %vm1608, %v1804, %v1755
        %v1806 = vrot.slane %v1755, 4
        %v1807 = vsel %vm1608, %v1767, %v1806
        %v1809 = vunpack.c.l.s4 1934713408
        %v1810 = vunpack.c.0.s8 %v1809
        %v1811 = vperm.slane %v1805, %v1810
        %v1813 = vunpack.c.l.s4 1934713408
        %v1814 = vunpack.c.0.s8 %v1813
        %v1815 = vperm.slane %v1807, %v1814
        %v1816 = vrot.slane %v1799, 4
        %v1817 = vsel %vm1608, %v1816, %v1775
        %v1818 = vrot.slane %v1775, 4
        %v1819 = vsel %vm1608, %v1799, %v1818
        %v1820 = vrot.slane %v1803, 4
        %v1821 = vsel %vm1608, %v1820, %v1779
        %v1822 = vrot.slane %v1779, 4
        %v1823 = vsel %vm1608, %v1803, %v1822
        %v1824 = vrot.slane %v1811, 4
        %v1825 = vsel %vm1608, %v1824, %v1787
        %v1826 = vrot.slane %v1787, 4
        %v1827 = vsel %vm1608, %v1811, %v1826
        %v1828 = vrot.slane %v1815, 4
        %v1829 = vsel %vm1608, %v1828, %v1791
        %v1830 = vrot.slane %v1791, 4
        %v1831 = vsel %vm1608, %v1815, %v1830
        %v1832 = vsel %vm1019, %v1705, -inf
        %v1833 = vsel %vm1019, %v1707, -inf
        %v1834 = vmax.f32 %v1832, %v1833
        %v1835 = vsel %vm1019, %v1709, -inf
        %v1836 = vsel %vm1019, %v1711, -inf
        %v1837 = vmax.f32 %v1835, %v1836
        %v1838 = vsel %vm1019, %v1713, -inf
        %v1839 = vsel %vm1019, %v1715, -inf
        %v1840 = vmax.f32 %v1838, %v1839
        %v1841 = vsel %vm1019, %v1717, -inf
        %v1842 = vsel %vm1019, %v1719, -inf
        %v1843 = vmax.f32 %v1841, %v1842
        %v1844 = vsel %vm1019, %v1817, -inf
        %v1845 = vsel %vm1019, %v1819, -inf
        %v1846 = vmax.f32 %v1844, %v1845
        %v1847 = vsel %vm1019, %v1821, -inf
        %v1848 = vsel %vm1019, %v1823, -inf
        %v1849 = vmax.f32 %v1847, %v1848
        %v1850 = vsel %vm1019, %v1825, -inf
        %v1851 = vsel %vm1019, %v1827, -inf
        %v1852 = vmax.f32 %v1850, %v1851
        %v1853 = vsel %vm1019, %v1829, -inf
        %v1854 = vsel %vm1019, %v1831, -inf
        %v1855 = vmax.f32 %v1853, %v1854
        %v1856 = vld [vmem:[%s431] sm:$0xff]
        %v1857 = vld [vmem:[%s431 + $0x8] sm:$0xff]
        %v1858 = vld [vmem:[%s431 + $0x10] sm:$0xff]
        %v1859 = vld [vmem:[%s431 + $0x18] sm:$0xff]
        %v1860 = vld [vmem:[%s431 + $0x20] sm:$0xff]
        %v1861 = vld [vmem:[%s431 + $0x28] sm:$0xff]
        %v1862 = vld [vmem:[%s431 + $0x30] sm:$0xff]
        %v1863 = vld [vmem:[%s431 + $0x38] sm:$0xff]
        %v1864 = vld [vmem:[%s5] sm:$0x1]
        %v1866 = vperm.slane %v1864, 0
        %v1868 = vmul.f32 %v1856, %v1866
        %v1869 = vmul.f32 %v1857, %v1866
        %v1870 = vmul.f32 %v1858, %v1866
        %v1871 = vmul.f32 %v1859, %v1866
        %v1872 = vmul.f32 %v1860, %v1866
        %v1873 = vmul.f32 %v1861, %v1866
        %v1874 = vmul.f32 %v1862, %v1866
        %v1875 = vmul.f32 %v1863, %v1866
        %v1876 = vld [vmem:[%s6] sm:$0x1]
        %v1878 = vperm.slane %v1876, 0
        %v1880 = vadd.f32 %v1868, %v1878
        %v1881 = vadd.f32 %v1869, %v1878
        %v1882 = vadd.f32 %v1870, %v1878
        %v1883 = vadd.f32 %v1871, %v1878
        %v1884 = vadd.f32 %v1872, %v1878
        %v1885 = vadd.f32 %v1873, %v1878
        %v1886 = vadd.f32 %v1874, %v1878
        %v1887 = vadd.f32 %v1875, %v1878
        %v1888 = vmax.f32 %v1880, 0.0
        %v1889 = vmax.f32 %v1881, 0.0
        %v1890 = vmax.f32 %v1882, 0.0
        %v1891 = vmax.f32 %v1883, 0.0
        %v1892 = vmax.f32 %v1884, 0.0
        %v1893 = vmax.f32 %v1885, 0.0
        %v1894 = vmax.f32 %v1886, 0.0
        %v1895 = vmax.f32 %v1887, 0.0
        %v1904 = vrot.slane %v1888, 7
        %v1905 = vrot.slane %v1889, 7
        %v1906 = vrot.slane %v1890, 7
        %v1907 = vrot.slane %v1891, 7
        %v1908 = vrot.slane %v1892, 7
        %v1909 = vrot.slane %v1893, 7
        %v1910 = vrot.slane %v1894, 7
        %v1911 = vrot.slane %v1895, 7
        %v1920 = vsel %vm600, 0.0, %v1904
        %v1921 = vsel %vm600, 0.0, %v1905
        %v1922 = vsel %vm600, 0.0, %v1906
        %v1923 = vsel %vm600, 0.0, %v1907
        %v1924 = vsel %vm600, 0.0, %v1908
        %v1925 = vsel %vm600, 0.0, %v1909
        %v1926 = vsel %vm600, 0.0, %v1910
        %v1927 = vsel %vm600, 0.0, %v1911
        %v1928 = vrot.slane %v1888, 1
        %v1929 = vrot.slane %v1889, 1
        %v1930 = vrot.slane %v1890, 1
        %v1931 = vrot.slane %v1891, 1
        %v1932 = vrot.slane %v1892, 1
        %v1933 = vrot.slane %v1893, 1
        %v1934 = vrot.slane %v1894, 1
        %v1935 = vrot.slane %v1895, 1
        %v1944 = vsel %vm697, %v1928, 0.0
        %v1945 = vsel %vm697, %v1929, 0.0
        %v1946 = vsel %vm697, %v1930, 0.0
        %v1947 = vsel %vm697, %v1931, 0.0
        %v1948 = vsel %vm697, %v1932, 0.0
        %v1949 = vsel %vm697, %v1933, 0.0
        %v1950 = vsel %vm697, %v1934, 0.0
        %v1951 = vsel %vm697, %v1935, 0.0
        %1952 = vrot.lane.b32.xlu0 %v1888, 16
        %v1953 = vpop.permute.xlu0 %1952
        %1954 = vrot.lane.b32.xlu0 %v1889, 16
        %v1955 = vpop.permute.xlu0 %1954
        %1956 = vrot.lane.b32.xlu0 %v1890, 16
        %v1957 = vpop.permute.xlu0 %1956
        %1958 = vrot.lane.b32.xlu0 %v1891, 16
        %v1959 = vpop.permute.xlu0 %1958
        %1960 = vrot.lane.b32.xlu0 %v1892, 16
        %v1961 = vpop.permute.xlu0 %1960
        %1962 = vrot.lane.b32.xlu0 %v1893, 16
        %v1963 = vpop.permute.xlu0 %1962
        %1964 = vrot.lane.b32.xlu0 %v1894, 16
        %v1965 = vpop.permute.xlu0 %1964
        %1966 = vrot.lane.b32.xlu0 %v1895, 16
        %v1967 = vpop.permute.xlu0 %1966
        %1984 = vrot.lane.b32.xlu0 %v1944, 32
        %v1985 = vpop.permute.xlu0 %1984
        %1986 = vrot.lane.b32.xlu0 %v1945, 32
        %v1987 = vpop.permute.xlu0 %1986
        %1988 = vrot.lane.b32.xlu0 %v1946, 32
        %v1989 = vpop.permute.xlu0 %1988
        %1990 = vrot.lane.b32.xlu0 %v1947, 32
        %v1991 = vpop.permute.xlu0 %1990
        %1992 = vrot.lane.b32.xlu0 %v1948, 32
        %v1993 = vpop.permute.xlu0 %1992
        %1994 = vrot.lane.b32.xlu0 %v1949, 32
        %v1995 = vpop.permute.xlu0 %1994
        %1996 = vrot.lane.b32.xlu0 %v1950, 32
        %v1997 = vpop.permute.xlu0 %1996
        %1998 = vrot.lane.b32.xlu0 %v1951, 32
        %v1999 = vpop.permute.xlu0 %1998
        %v2008 = vsel %vm1019, %v1920, %v1953
        %v2009 = vsel %vm1019, %v1921, %v1955
        %v2010 = vsel %vm1019, %v1922, %v1957
        %v2011 = vsel %vm1019, %v1923, %v1959
        %v2012 = vsel %vm1019, %v1924, %v1961
        %v2013 = vsel %vm1019, %v1925, %v1963
        %v2014 = vsel %vm1019, %v1926, %v1965
        %v2015 = vsel %vm1019, %v1927, %v1967
        %vm2016 = vcmask 261120
        %v2017 = vsel %vm2016, %v2008, %v1985
        %v2018 = vsel %vm2016, %v2009, %v1987
        %v2019 = vsel %vm2016, %v2010, %v1989
        %v2020 = vsel %vm2016, %v2011, %v1991
        %v2021 = vsel %vm2016, %v2012, %v1993
        %v2022 = vsel %vm2016, %v2013, %v1995
        %v2023 = vsel %vm2016, %v2014, %v1997
        %v2024 = vsel %vm2016, %v2015, %v1999
        %2033 = vrot.lane.b32.xlu0 %v2017, 48
        %v2034 = vpop.permute.xlu0 %2033
        %2035 = vrot.lane.b32.xlu0 %v2018, 48
        %v2036 = vpop.permute.xlu0 %2035
        %2037 = vrot.lane.b32.xlu0 %v2019, 48
        %v2038 = vpop.permute.xlu0 %2037
        %2039 = vrot.lane.b32.xlu0 %v2020, 48
        %v2040 = vpop.permute.xlu0 %2039
        %2041 = vrot.lane.b32.xlu0 %v2021, 48
        %v2042 = vpop.permute.xlu0 %2041
        %2043 = vrot.lane.b32.xlu0 %v2022, 48
        %v2044 = vpop.permute.xlu0 %2043
        %2045 = vrot.lane.b32.xlu0 %v2023, 48
        %v2046 = vpop.permute.xlu0 %2045
        %2047 = vrot.lane.b32.xlu0 %v2024, 48
        %v2048 = vpop.permute.xlu0 %2047
        %2057 = vrot.lane.b32.xlu0 %v2018, 96
        %v2058 = vpop.permute.xlu0 %2057
        %2059 = vrot.lane.b32.xlu0 %v2019, 96
        %v2060 = vpop.permute.xlu0 %2059
        %2061 = vrot.lane.b32.xlu0 %v2020, 96
        %v2062 = vpop.permute.xlu0 %2061
        %2063 = vrot.lane.b32.xlu0 %v2021, 96
        %v2064 = vpop.permute.xlu0 %2063
        %2065 = vrot.lane.b32.xlu0 %v2022, 96
        %v2066 = vpop.permute.xlu0 %2065
        %2067 = vrot.lane.b32.xlu0 %v2023, 96
        %v2068 = vpop.permute.xlu0 %2067
        %2069 = vrot.lane.b32.xlu0 %v2024, 96
        %v2070 = vpop.permute.xlu0 %2069
        %2071 = vrot.lane.b32.xlu0 0.0, 96
        %v2072 = vpop.permute.xlu0 %2071
        %v2081 = vsel %vm1307, 0.0, %v2034
        %v2082 = vsel %vm1307, %v2017, %v2036
        %v2083 = vsel %vm1307, %v2018, %v2038
        %v2084 = vsel %vm1307, %v2019, %v2040
        %v2085 = vsel %vm1307, %v2020, %v2042
        %v2086 = vsel %vm1307, %v2021, %v2044
        %v2087 = vsel %vm1307, %v2022, %v2046
        %v2088 = vsel %vm1307, %v2023, %v2048
        %vm2089 = vcmask 785408
        %v2090 = vsel %vm2089, %v2081, %v2058
        %v2091 = vsel %vm2089, %v2082, %v2060
        %v2092 = vsel %vm2089, %v2083, %v2062
        %v2093 = vsel %vm2089, %v2084, %v2064
        %v2094 = vsel %vm2089, %v2085, %v2066
        %v2095 = vsel %vm2089, %v2086, %v2068
        %v2096 = vsel %vm2089, %v2087, %v2070
        %v2097 = vsel %vm2089, %v2088, %v2072
        %v2098 = vld [vmem:[%s7] sm:$0xff]
        %v2099 = vld [vmem:[%s7 + $0x8] sm:$0xff]
        %v2100 = vld [vmem:[%s7 + $0x10] sm:$0xff]
        %v2101 = vld [vmem:[%s7 + $0x18] sm:$0xff]
        %v2102 = vld [vmem:[%s7 + $0x20] sm:$0xff]
        %v2103 = vld [vmem:[%s7 + $0x28] sm:$0xff]
        %v2104 = vld [vmem:[%s7 + $0x30] sm:$0xff]
        %v2105 = vld [vmem:[%s7 + $0x38] sm:$0xff]
        %v2106 = vld [vmem:[%s7 + $0x40] sm:$0xff]
        %v2107 = vld [vmem:[%s7 + $0x48] sm:$0xff]
        %v2108 = vld [vmem:[%s7 + $0x50] sm:$0xff]
        %v2109 = vld [vmem:[%s7 + $0x58] sm:$0xff]
        %v2110 = vld [vmem:[%s7 + $0x60] sm:$0xff]
        %v2111 = vld [vmem:[%s7 + $0x68] sm:$0xff]
        %v2112 = vld [vmem:[%s7 + $0x70] sm:$0xff]
        %v2113 = vld [vmem:[%s7 + $0x78] sm:$0xff]
        %v2114 = vld [vmem:[%s7 + $0x80] sm:$0xff]
        %v2115 = vld [vmem:[%s7 + $0x88] sm:$0xff]
        %v2116 = vsel %vm1019, %v2058, 0
        %v2118 = vsel %vm1019, %v2060, 0
        %v2120 = vsel %vm1019, %v2062, 0
        %v2122 = vsel %vm1019, %v2064, 0
        %v2124 = vsel %vm1019, %v2066, 0
        %v2126 = vsel %vm1019, %v2068, 0
        %v2128 = vsel %vm1019, %v2070, 0
        %v2130 = vsel %vm1019, %v2072, 0
        %2132 = vmatpush.msra.mxu0 %v2113
        %2133 = vmatpush.msra.mxu0 %v2112
        %2134 = vmatpush.msra.mxu0 %v2111
        %2135 = vmatpush.msra.mxu0 %v2110
        %2136 = vmatpush.msra.mxu0 %v2109
        %2137 = vmatpush.msra.mxu0 %v2108
        %2138 = vmatpush.msra.mxu0 %v2107
        %2139 = vmatpush.msra.mxu0 %v2106
        %2140 = vmatpush.msra.mxu0 %v2105
        %2141 = vmatpush.msra.mxu0 %v2104
        %2142 = vmatpush.msra.mxu0 %v2103
        %2143 = vmatpush.msra.mxu0 %v2102
        %2144 = vmatpush.msra.mxu0 %v2101
        %2145 = vmatpush.msra.mxu0 %v2100
        %2146 = vmatpush.msra.mxu0 %v2099
        %2147 = vmatpush.msra.mxu0 %v2098
        %2148 = vmatmul.f32.gmra.mxu0 %v2090
        %v2149 = vpop.f32.mrf.mxu0
        %v2150 = vadd.f32 0.0, %v2149
        %2151 = vmatmul.f32.gmra.mxu0 %v2091
        %v2152 = vpop.f32.mrf.mxu0
        %v2153 = vadd.f32 0.0, %v2152
        %2154 = vmatmul.f32.gmra.mxu0 %v2092
        %v2155 = vpop.f32.mrf.mxu0
        %v2156 = vadd.f32 0.0, %v2155
        %2157 = vmatmul.f32.gmra.mxu0 %v2093
        %v2158 = vpop.f32.mrf.mxu0
        %v2159 = vadd.f32 0.0, %v2158
        %2160 = vmatmul.f32.gmra.mxu0 %v2094
        %v2161 = vpop.f32.mrf.mxu0
        %v2162 = vadd.f32 0.0, %v2161
        %2163 = vmatmul.f32.gmra.mxu0 %v2095
        %v2164 = vpop.f32.mrf.mxu0
        %v2165 = vadd.f32 0.0, %v2164
        %2166 = vmatmul.f32.gmra.mxu0 %v2096
        %v2167 = vpop.f32.mrf.mxu0
        %v2168 = vadd.f32 0.0, %v2167
        %2169 = vmatmul.f32.gmra.mxu0 %v2097
        %v2170 = vpop.f32.mrf.mxu0
        %v2171 = vadd.f32 0.0, %v2170
        %2172 = vdwg.mxu0
        %2173 = vmatpush.msra.mxu0 0.0
        %2174 = vmatpush.msra.mxu0 0.0
        %2175 = vmatpush.msra.mxu0 0.0
        %2176 = vmatpush.msra.mxu0 0.0
        %2177 = vmatpush.msra.mxu0 0.0
        %2178 = vmatpush.msra.mxu0 0.0
        %2179 = vmatpush.msra.mxu0 0.0
        %2180 = vmatpush.msra.mxu0 0.0
        %2181 = vmatpush.msra.mxu0 0.0
        %2182 = vmatpush.msra.mxu0 0.0
        %2183 = vmatpush.msra.mxu0 0.0
        %2184 = vmatpush.msra.mxu0 0.0
        %2185 = vmatpush.msra.mxu0 0.0
        %2186 = vmatpush.msra.mxu0 0.0
        %2187 = vmatpush.msra.mxu0 %v2115
        %2188 = vmatpush.msra.mxu0 %v2114
        %2189 = vmatmul.f32.gmra.mxu0 %v2116
        %v2190 = vpop.f32.mrf.mxu0
        %v2191 = vadd.f32 %v2150, %v2190
        %2192 = vmatmul.f32.gmra.mxu0 %v2118
        %v2193 = vpop.f32.mrf.mxu0
        %v2194 = vadd.f32 %v2153, %v2193
        %2195 = vmatmul.f32.gmra.mxu0 %v2120
        %v2196 = vpop.f32.mrf.mxu0
        %v2197 = vadd.f32 %v2156, %v2196
        %2198 = vmatmul.f32.gmra.mxu0 %v2122
        %v2199 = vpop.f32.mrf.mxu0
        %v2200 = vadd.f32 %v2159, %v2199
        %2201 = vmatmul.f32.gmra.mxu0 %v2124
        %v2202 = vpop.f32.mrf.mxu0
        %v2203 = vadd.f32 %v2162, %v2202
        %2204 = vmatmul.f32.gmra.mxu0 %v2126
        %v2205 = vpop.f32.mrf.mxu0
        %v2206 = vadd.f32 %v2165, %v2205
        %2207 = vmatmul.f32.gmra.mxu0 %v2128
        %v2208 = vpop.f32.mrf.mxu0
        %v2209 = vadd.f32 %v2168, %v2208
        %2210 = vmatmul.f32.gmra.mxu0 %v2130
        %v2211 = vpop.f32.mrf.mxu0
        %v2212 = vadd.f32 %v2171, %v2211
        %2213 = vdwg.mxu0
        %v2214 = vadd.f32 %v1834, %v2191
        %v2215 = vadd.f32 %v1837, %v2194
        %v2216 = vadd.f32 %v1840, %v2197
        %v2217 = vadd.f32 %v1843, %v2200
        %v2218 = vadd.f32 %v1846, %v2203
        %v2219 = vadd.f32 %v1849, %v2206
        %v2220 = vadd.f32 %v1852, %v2209
        %v2221 = vadd.f32 %v1855, %v2212
        %v2222 = vld [vmem:[%s8] sm:$0x1]
        %v2224 = vperm.slane %v2222, 0
        %v2226 = vmul.f32 %v2214, %v2224
        %v2227 = vmul.f32 %v2215, %v2224
        %v2228 = vmul.f32 %v2216, %v2224
        %v2229 = vmul.f32 %v2217, %v2224
        %v2230 = vmul.f32 %v2218, %v2224
        %v2231 = vmul.f32 %v2219, %v2224
        %v2232 = vmul.f32 %v2220, %v2224
        %v2233 = vmul.f32 %v2221, %v2224
        %v2234 = vld [vmem:[%s9] sm:$0x1]
        %v2236 = vperm.slane %v2234, 0
        %v2238 = vadd.f32 %v2226, %v2236
        %v2239 = vadd.f32 %v2227, %v2236
        %v2240 = vadd.f32 %v2228, %v2236
        %v2241 = vadd.f32 %v2229, %v2236
        %v2242 = vadd.f32 %v2230, %v2236
        %v2243 = vadd.f32 %v2231, %v2236
        %v2244 = vadd.f32 %v2232, %v2236
        %v2245 = vadd.f32 %v2233, %v2236
        %v2246 = vmax.f32 %v2238, 0.0
        %v2247 = vmax.f32 %v2239, 0.0
        %v2248 = vmax.f32 %v2240, 0.0
        %v2249 = vmax.f32 %v2241, 0.0
        %v2250 = vmax.f32 %v2242, 0.0
        %v2251 = vmax.f32 %v2243, 0.0
        %v2252 = vmax.f32 %v2244, 0.0
        %v2253 = vmax.f32 %v2245, 0.0
        %v2262 = vrot.slane %v2246, 7
        %v2263 = vrot.slane %v2247, 7
        %v2264 = vrot.slane %v2248, 7
        %v2265 = vrot.slane %v2249, 7
        %v2266 = vrot.slane %v2250, 7
        %v2267 = vrot.slane %v2251, 7
        %v2268 = vrot.slane %v2252, 7
        %v2269 = vrot.slane %v2253, 7
        %v2278 = vsel %vm600, 0.0, %v2262
        %v2279 = vsel %vm600, 0.0, %v2263
        %v2280 = vsel %vm600, 0.0, %v2264
        %v2281 = vsel %vm600, 0.0, %v2265
        %v2282 = vsel %vm600, 0.0, %v2266
        %v2283 = vsel %vm600, 0.0, %v2267
        %v2284 = vsel %vm600, 0.0, %v2268
        %v2285 = vsel %vm600, 0.0, %v2269
        %v2286 = vrot.slane %v2246, 1
        %v2287 = vrot.slane %v2247, 1
        %v2288 = vrot.slane %v2248, 1
        %v2289 = vrot.slane %v2249, 1
        %v2290 = vrot.slane %v2250, 1
        %v2291 = vrot.slane %v2251, 1
        %v2292 = vrot.slane %v2252, 1
        %v2293 = vrot.slane %v2253, 1
        %v2302 = vsel %vm697, %v2286, 0.0
        %v2303 = vsel %vm697, %v2287, 0.0
        %v2304 = vsel %vm697, %v2288, 0.0
        %v2305 = vsel %vm697, %v2289, 0.0
        %v2306 = vsel %vm697, %v2290, 0.0
        %v2307 = vsel %vm697, %v2291, 0.0
        %v2308 = vsel %vm697, %v2292, 0.0
        %v2309 = vsel %vm697, %v2293, 0.0
        %2310 = vrot.lane.b32.xlu0 %v2246, 16
        %v2311 = vpop.permute.xlu0 %2310
        %2312 = vrot.lane.b32.xlu0 %v2247, 16
        %v2313 = vpop.permute.xlu0 %2312
        %2314 = vrot.lane.b32.xlu0 %v2248, 16
        %v2315 = vpop.permute.xlu0 %2314
        %2316 = vrot.lane.b32.xlu0 %v2249, 16
        %v2317 = vpop.permute.xlu0 %2316
        %2318 = vrot.lane.b32.xlu0 %v2250, 16
        %v2319 = vpop.permute.xlu0 %2318
        %2320 = vrot.lane.b32.xlu0 %v2251, 16
        %v2321 = vpop.permute.xlu0 %2320
        %2322 = vrot.lane.b32.xlu0 %v2252, 16
        %v2323 = vpop.permute.xlu0 %2322
        %2324 = vrot.lane.b32.xlu0 %v2253, 16
        %v2325 = vpop.permute.xlu0 %2324
        %2342 = vrot.lane.b32.xlu0 %v2302, 32
        %v2343 = vpop.permute.xlu0 %2342
        %2344 = vrot.lane.b32.xlu0 %v2303, 32
        %v2345 = vpop.permute.xlu0 %2344
        %2346 = vrot.lane.b32.xlu0 %v2304, 32
        %v2347 = vpop.permute.xlu0 %2346
        %2348 = vrot.lane.b32.xlu0 %v2305, 32
        %v2349 = vpop.permute.xlu0 %2348
        %2350 = vrot.lane.b32.xlu0 %v2306, 32
        %v2351 = vpop.permute.xlu0 %2350
        %2352 = vrot.lane.b32.xlu0 %v2307, 32
        %v2353 = vpop.permute.xlu0 %2352
        %2354 = vrot.lane.b32.xlu0 %v2308, 32
        %v2355 = vpop.permute.xlu0 %2354
        %2356 = vrot.lane.b32.xlu0 %v2309, 32
        %v2357 = vpop.permute.xlu0 %2356
        %v2366 = vsel %vm1019, %v2278, %v2311
        %v2367 = vsel %vm1019, %v2279, %v2313
        %v2368 = vsel %vm1019, %v2280, %v2315
        %v2369 = vsel %vm1019, %v2281, %v2317
        %v2370 = vsel %vm1019, %v2282, %v2319
        %v2371 = vsel %vm1019, %v2283, %v2321
        %v2372 = vsel %vm1019, %v2284, %v2323
        %v2373 = vsel %vm1019, %v2285, %v2325
        %v2374 = vsel %vm2016, %v2366, %v2343
        %v2375 = vsel %vm2016, %v2367, %v2345
        %v2376 = vsel %vm2016, %v2368, %v2347
        %v2377 = vsel %vm2016, %v2369, %v2349
        %v2378 = vsel %vm2016, %v2370, %v2351
        %v2379 = vsel %vm2016, %v2371, %v2353
        %v2380 = vsel %vm2016, %v2372, %v2355
        %v2381 = vsel %vm2016, %v2373, %v2357
        %2390 = vrot.lane.b32.xlu0 %v2374, 48
        %v2391 = vpop.permute.xlu0 %2390
        %2392 = vrot.lane.b32.xlu0 %v2375, 48
        %v2393 = vpop.permute.xlu0 %2392
        %2394 = vrot.lane.b32.xlu0 %v2376, 48
        %v2395 = vpop.permute.xlu0 %2394
        %2396 = vrot.lane.b32.xlu0 %v2377, 48
        %v2397 = vpop.permute.xlu0 %2396
        %2398 = vrot.lane.b32.xlu0 %v2378, 48
        %v2399 = vpop.permute.xlu0 %2398
        %2400 = vrot.lane.b32.xlu0 %v2379, 48
        %v2401 = vpop.permute.xlu0 %2400
        %2402 = vrot.lane.b32.xlu0 %v2380, 48
        %v2403 = vpop.permute.xlu0 %2402
        %2404 = vrot.lane.b32.xlu0 %v2381, 48
        %v2405 = vpop.permute.xlu0 %2404
        %2414 = vrot.lane.b32.xlu0 %v2375, 96
        %v2415 = vpop.permute.xlu0 %2414
        %2416 = vrot.lane.b32.xlu0 %v2376, 96
        %v2417 = vpop.permute.xlu0 %2416
        %2418 = vrot.lane.b32.xlu0 %v2377, 96
        %v2419 = vpop.permute.xlu0 %2418
        %2420 = vrot.lane.b32.xlu0 %v2378, 96
        %v2421 = vpop.permute.xlu0 %2420
        %2422 = vrot.lane.b32.xlu0 %v2379, 96
        %v2423 = vpop.permute.xlu0 %2422
        %2424 = vrot.lane.b32.xlu0 %v2380, 96
        %v2425 = vpop.permute.xlu0 %2424
        %2426 = vrot.lane.b32.xlu0 %v2381, 96
        %v2427 = vpop.permute.xlu0 %2426
        %v2435 = vsel %vm1307, 0.0, %v2391
        %v2436 = vsel %vm1307, %v2374, %v2393
        %v2437 = vsel %vm1307, %v2375, %v2395
        %v2438 = vsel %vm1307, %v2376, %v2397
        %v2439 = vsel %vm1307, %v2377, %v2399
        %v2440 = vsel %vm1307, %v2378, %v2401
        %v2441 = vsel %vm1307, %v2379, %v2403
        %v2442 = vsel %vm1307, %v2380, %v2405
        %v2443 = vsel %vm2089, %v2435, %v2415
        %v2444 = vsel %vm2089, %v2436, %v2417
        %v2445 = vsel %vm2089, %v2437, %v2419
        %v2446 = vsel %vm2089, %v2438, %v2421
        %v2447 = vsel %vm2089, %v2439, %v2423
        %v2448 = vsel %vm2089, %v2440, %v2425
        %v2449 = vsel %vm2089, %v2441, %v2427
        %v2450 = vsel %vm2089, %v2442, %v2072
        %v2451 = vld [vmem:[%s10] sm:$0xff]
        %v2452 = vld [vmem:[%s10 + $0x8] sm:$0xff]
        %v2453 = vld [vmem:[%s10 + $0x10] sm:$0xff]
        %v2454 = vld [vmem:[%s10 + $0x18] sm:$0xff]
        %v2455 = vld [vmem:[%s10 + $0x20] sm:$0xff]
        %v2456 = vld [vmem:[%s10 + $0x28] sm:$0xff]
        %v2457 = vld [vmem:[%s10 + $0x30] sm:$0xff]
        %v2458 = vld [vmem:[%s10 + $0x38] sm:$0xff]
        %v2459 = vld [vmem:[%s10 + $0x40] sm:$0xff]
        %v2460 = vld [vmem:[%s10 + $0x48] sm:$0xff]
        %v2461 = vld [vmem:[%s10 + $0x50] sm:$0xff]
        %v2462 = vld [vmem:[%s10 + $0x58] sm:$0xff]
        %v2463 = vld [vmem:[%s10 + $0x60] sm:$0xff]
        %v2464 = vld [vmem:[%s10 + $0x68] sm:$0xff]
        %v2465 = vld [vmem:[%s10 + $0x70] sm:$0xff]
        %v2466 = vld [vmem:[%s10 + $0x78] sm:$0xff]
        %v2467 = vld [vmem:[%s10 + $0x80] sm:$0xff]
        %v2468 = vld [vmem:[%s10 + $0x88] sm:$0xff]
        %v2469 = vld [vmem:[%s11] sm:$0x1]
        %v2471 = vperm.slane %v2469, 0
        %v2473 = vsel %vm1019, %v2415, 0
        %v2475 = vsel %vm1019, %v2417, 0
        %v2477 = vsel %vm1019, %v2419, 0
        %v2479 = vsel %vm1019, %v2421, 0
        %v2481 = vsel %vm1019, %v2423, 0
        %v2483 = vsel %vm1019, %v2425, 0
        %v2485 = vsel %vm1019, %v2427, 0
        %2487 = vmatpush.msra.mxu0 %v2466
        %2488 = vmatpush.msra.mxu0 %v2465
        %2489 = vmatpush.msra.mxu0 %v2464
        %2490 = vmatpush.msra.mxu0 %v2463
        %2491 = vmatpush.msra.mxu0 %v2462
        %2492 = vmatpush.msra.mxu0 %v2461
        %2493 = vmatpush.msra.mxu0 %v2460
        %2494 = vmatpush.msra.mxu0 %v2459
        %2495 = vmatpush.msra.mxu0 %v2458
        %2496 = vmatpush.msra.mxu0 %v2457
        %2497 = vmatpush.msra.mxu0 %v2456
        %2498 = vmatpush.msra.mxu0 %v2455
        %2499 = vmatpush.msra.mxu0 %v2454
        %2500 = vmatpush.msra.mxu0 %v2453
        %2501 = vmatpush.msra.mxu0 %v2452
        %2502 = vmatpush.msra.mxu0 %v2451
        %2503 = vmatmul.f32.gmra.mxu0 %v2443
        %v2504 = vpop.f32.mrf.mxu0
        %v2505 = vadd.f32 %v2471, %v2504
        %2506 = vmatmul.f32.gmra.mxu0 %v2444
        %v2507 = vpop.f32.mrf.mxu0
        %v2508 = vadd.f32 %v2471, %v2507
        %2509 = vmatmul.f32.gmra.mxu0 %v2445
        %v2510 = vpop.f32.mrf.mxu0
        %v2511 = vadd.f32 %v2471, %v2510
        %2512 = vmatmul.f32.gmra.mxu0 %v2446
        %v2513 = vpop.f32.mrf.mxu0
        %v2514 = vadd.f32 %v2471, %v2513
        %2515 = vmatmul.f32.gmra.mxu0 %v2447
        %v2516 = vpop.f32.mrf.mxu0
        %v2517 = vadd.f32 %v2471, %v2516
        %2518 = vmatmul.f32.gmra.mxu0 %v2448
        %v2519 = vpop.f32.mrf.mxu0
        %v2520 = vadd.f32 %v2471, %v2519
        %2521 = vmatmul.f32.gmra.mxu0 %v2449
        %v2522 = vpop.f32.mrf.mxu0
        %v2523 = vadd.f32 %v2471, %v2522
        %2524 = vmatmul.f32.gmra.mxu0 %v2450
        %v2525 = vpop.f32.mrf.mxu0
        %v2526 = vadd.f32 %v2471, %v2525
        %2527 = vdwg.mxu0
        %2528 = vmatpush.msra.mxu0 0.0
        %2529 = vmatpush.msra.mxu0 0.0
        %2530 = vmatpush.msra.mxu0 0.0
        %2531 = vmatpush.msra.mxu0 0.0
        %2532 = vmatpush.msra.mxu0 0.0
        %2533 = vmatpush.msra.mxu0 0.0
        %2534 = vmatpush.msra.mxu0 0.0
        %2535 = vmatpush.msra.mxu0 0.0
        %2536 = vmatpush.msra.mxu0 0.0
        %2537 = vmatpush.msra.mxu0 0.0
        %2538 = vmatpush.msra.mxu0 0.0
        %2539 = vmatpush.msra.mxu0 0.0
        %2540 = vmatpush.msra.mxu0 0.0
        %2541 = vmatpush.msra.mxu0 0.0
        %2542 = vmatpush.msra.mxu0 %v2468
        %2543 = vmatpush.msra.mxu0 %v2467
        %2544 = vmatmul.f32.gmra.mxu0 %v2473
        %v2545 = vpop.f32.mrf.mxu0
        %v2546 = vadd.f32 %v2505, %v2545
        %2547 = vmatmul.f32.gmra.mxu0 %v2475
        %v2548 = vpop.f32.mrf.mxu0
        %v2549 = vadd.f32 %v2508, %v2548
        %2550 = vmatmul.f32.gmra.mxu0 %v2477
        %v2551 = vpop.f32.mrf.mxu0
        %v2552 = vadd.f32 %v2511, %v2551
        %2553 = vmatmul.f32.gmra.mxu0 %v2479
        %v2554 = vpop.f32.mrf.mxu0
        %v2555 = vadd.f32 %v2514, %v2554
        %2556 = vmatmul.f32.gmra.mxu0 %v2481
        %v2557 = vpop.f32.mrf.mxu0
        %v2558 = vadd.f32 %v2517, %v2557
        %2559 = vmatmul.f32.gmra.mxu0 %v2483
        %v2560 = vpop.f32.mrf.mxu0
        %v2561 = vadd.f32 %v2520, %v2560
        %2562 = vmatmul.f32.gmra.mxu0 %v2485
        %v2563 = vpop.f32.mrf.mxu0
        %v2564 = vadd.f32 %v2523, %v2563
        %2565 = vmatmul.f32.gmra.mxu0 %v2130
        %v2566 = vpop.f32.mrf.mxu0
        %v2567 = vadd.f32 %v2526, %v2566
        %2568 = vdwg.mxu0
        %v2569 = vmul.f32 %v2546, %v1856
        %v2570 = vmul.f32 %v2549, %v1857
        %v2571 = vmul.f32 %v2552, %v1858
        %v2572 = vmul.f32 %v2555, %v1859
        %v2573 = vmul.f32 %v2558, %v1860
        %v2574 = vmul.f32 %v2561, %v1861
        %v2575 = vmul.f32 %v2564, %v1862
        %v2576 = vmul.f32 %v2567, %v1863
        %2577 = vst.msk [vmem:[%s421] sm:$0xff] %vm1019, %v2569
        %2578 = vst.msk [vmem:[%s421 + $0x8] sm:$0xff] %vm1019, %v2570
        %2579 = vst.msk [vmem:[%s421 + $0x10] sm:$0xff] %vm1019, %v2571
        %2580 = vst.msk [vmem:[%s421 + $0x18] sm:$0xff] %vm1019, %v2572
        %2581 = vst.msk [vmem:[%s421 + $0x20] sm:$0xff] %vm1019, %v2573
        %2582 = vst.msk [vmem:[%s421 + $0x28] sm:$0xff] %vm1019, %v2574
        %2583 = vst.msk [vmem:[%s421 + $0x30] sm:$0xff] %vm1019, %v2575
        %2584 = vst.msk [vmem:[%s421 + $0x38] sm:$0xff] %vm1019, %v2576
        %s2585 = sand.u32 %s296, 1
        %s2586 = scalar_lea.sflag [#allocation3], %s2585
        %s2587 = sand.u32 %s296, 1
        %s2588 = smul.addr %s2587, 64
        %s2589 = scalar_lea.vmem [#allocation2], %s2588
        // Predicated region
        $region69: #{tpu_custom_call.1} parent=67 // pred_check
          %p2590 = pneg %p306
        $region70: #{tpu_custom_call.1} parent=67 // pred_check_branch
          %2592 = sbr.rel (%p2590) target = $region72
        $region71: #{tpu_custom_call.1} parent=67 // pred_region
          %2594 = vsyncadd %s2586, 0
          %s2595 = smul.addr %s26, 8
          %s2596 = smul.addr %s2595, 8
          %s2597 = scalar_lea.hbm %s12, %s2596
          %s2598 = sshll.u32 %s2589, 4
          %s2599 = int_to_ptr.vmem [resolvable:$true] %s2598
          %s2600 = sshll.u32 %s2597, 4
          %s2601 = int_to_ptr.hbm [resolvable:$true] %s2600
          %2606 = dma.vmem_to_hbm [thread:$0]  %s2599, 1024, %s2601, %s2586, 128, 128, 8
        $region72: #{tpu_custom_call.1} parent=67 // pred_fallthru
          _
      $region68: #{tpu_custom_call.1} parent=5 // pred_fallthru
        _
      %p2607 = scmp.le.s32.totalorder 2, %s21
      // Predicated region
      $region73: #{tpu_custom_call.1} parent=5 // pred_check
        %p2608 = pneg %p2607
      $region74: #{tpu_custom_call.1} parent=5 // pred_check_branch
        %2610 = sbr.rel (%p2608) target = $region76
      $region75: #{tpu_custom_call.1} parent=5 // pred_region
        %s2611 = ssub.s32 %s21, 2
        // Predicated region
        $region77: #{tpu_custom_call.1} parent=75 // pred_check
          %p2612 = pneg %p312
        $region78: #{tpu_custom_call.1} parent=75 // pred_check_branch
          %2614 = sbr.rel (%p2612) target = $region80
        $region79: #{tpu_custom_call.1} parent=75 // pred_region
          %s2615 = sand.u32 %s297, 1
          %s2616 = scalar_lea.sflag [#allocation3], %s2615
          %s2617 = sand.u32 %s297, 1
          %s2618 = smul.addr %s2617, 64
          %s2619 = scalar_lea.vmem [#allocation2], %s2618
          %2621 = dma.done %s2616, 1024
        $region80: #{tpu_custom_call.1} parent=75 // pred_fallthru
          _
      $region76: #{tpu_custom_call.1} parent=5 // pred_fallthru
        _
    $region6: #{tpu_custom_call.1} parent=1 // loop_footer
      %s25 = sadd.s32 1, %s21
    $region7: #{tpu_custom_call.1} parent=1 // loop_footer_branch
      %20 = sbr.rel target = $region3
    $region8: #{tpu_custom_call.1} parent=1 // loop_exit
      _
    %2622 = vsyncpa [#allocation3], 1
    %s2623 = scalar_lea.sflag [#allocation3], 1
    %2624 = vsyncpa %s2623, 1

</llo_original>
